<compile_context>
chip_gen: v7x
topology: tpu7x:2x2x1
jax: 0.10.0
libtpu: 0.0.40
codegen_flags: <defaults>
</compile_context>

<pallas_src>
import functools

import jax
import jax.numpy as jnp
from jax import lax
from jax.experimental import pallas as pl
from jax.experimental.pallas import tpu as pltpu


# ----------------------------- Pallas kernel --------------------------------

def bigbird_attn_kernel(x_ref, wqkv_ref, rand_ref, wpb_ref, bp_ref, o_ref, *,
                        num_heads, head_size, window_size, num_global_tokens,
                        num_random_tokens, seq_len):
    T = seq_len
    H = num_heads
    hs = head_size
    C = H * hs

    x = x_ref[0]                                              # (T, C) bf16

    # Fused QKV projection: one lane-dense (T,C)x(C,3C) MXU matmul.
    # The 1/sqrt(hs) score scale is pre-folded into the Q columns of wqkv.
    qkv = jnp.dot(x, wqkv_ref[...],
                  preferred_element_type=jnp.float32)         # (T, 3C) f32

    # One relayout + ONE bf16 cast for the whole slab; heads become a leading
    # batch dimension for all subsequent contractions.
    qkv = qkv.reshape(T, 3 * H, hs).transpose(1, 0, 2)        # (3H, T, hs)
    qkv = qkv.astype(jnp.bfloat16)
    q = qkv[:H]                                               # (H, T, hs)
    k = qkv[H:2 * H]                                          # (H, T, hs)
    v = qkv[2 * H:]                                           # (H, T, hs)

    # All-head scores in one batched MXU contraction (no explicit k.T).
    s = jnp.einsum('hqd,hkd->hqk', q, k,
                   preferred_element_type=jnp.float32)        # (H, T, T) f32

    # Sparse-attention keep mask rebuilt from index math (no (H,T,T) HBM mask).
    rows = lax.broadcasted_iota(jnp.int32, (T, T), 0)
    cols = lax.broadcasted_iota(jnp.int32, (T, T), 1)
    causal = rows >= cols
    local = (cols >= rows - window_size + 1) & (cols <= rows)
    glob = (rows < num_global_tokens) | (cols < num_global_tokens)
    static_keep = local | glob                                # (T, T)

    # Random-attention columns: tiny (H, T, nr) int32 table, compared head-
    # batched against the column index plane.
    rc = rand_ref[...]                                        # (H, T, nr)
    rand_keep = cols[None] == rc[:, :, 0:1]                   # (H, T, T)
    for r in range(1, num_random_tokens):
        rand_keep = rand_keep | (cols[None] == rc[:, :, r:r + 1])

    keep = (static_keep[None] | rand_keep) & causal[None]     # (H, T, T)

    # Single select (no select + add). -1e9 is safe: every row keeps its
    # diagonal via causal ∧ local, so no row is fully masked.
    s = jnp.where(keep, s, -1e9)

    # Softmax in f32; reciprocal on the EUP.
    s = s - jnp.max(s, axis=-1, keepdims=True)
    e = jnp.exp(s)
    p = e * pl.reciprocal(jnp.sum(e, axis=-1, keepdims=True), approx=True)

    # Batched PV, then the output projection fused as per-head blocks of
    # Wproj^T summed over heads -- this removes the lane-misaligned concat.
    pv = jnp.einsum('hqk,hkd->hqd', p.astype(jnp.bfloat16), v,
                    preferred_element_type=jnp.float32)       # (H, T, hs)
    proj = jnp.einsum('hqd,hdc->hqc', pv.astype(jnp.bfloat16), wpb_ref[...],
                      preferred_element_type=jnp.float32)     # (H, T, C)
    out = jnp.sum(proj, axis=0) + bp_ref[...]                 # (T, C) f32

    o_ref[0] = out.astype(o_ref.dtype)                        # bf16 writeback


# ------------------------------- wrapper -------------------------------------

def bigbird_attention(x, wq, wk, wv, rand_cols, wp, bp, *, num_heads,
                      head_size, window_size, num_global_tokens,
                      num_random_tokens):
    """x: (B,T,C); wq/wk/wv: (H,hs,C) torch nn.Linear layout; rand_cols:
    (H,T,nr) int32; wp: (C,C) torch layout; bp: (1,C).  Returns (B,T,C) bf16."""
    B, T, C = x.shape
    H = num_heads
    hs = head_size
    assert H * hs == C

    scale = hs ** (-0.5)

    # Pre-stack + pre-transpose weights once, outside the kernel.
    # Column h*hs+d of each block is w[h, d, :], so fused x @ Wqkv reproduces
    # the per-head x @ w[h].T projections.  The score scale is folded into Q.
    wq_t = (wq * scale).reshape(H * hs, C).T                  # (C, C)
    wk_t = wk.reshape(H * hs, C).T
    wv_t = wv.reshape(H * hs, C).T
    wqkv = jnp.concatenate([wq_t, wk_t, wv_t], axis=1).astype(jnp.bfloat16)

    # Per-head row-blocks of Wproj^T: out = sum_h pv_h @ wpb[h].
    wpb = wp.T.reshape(H, hs, C).astype(jnp.bfloat16)         # (H, hs, C)
    bp_f32 = bp.astype(jnp.float32)
    x_bf = x.astype(jnp.bfloat16)

    nr = min(num_random_tokens, T)
    if nr == 0:
        # sentinel column that never matches -> empty random mask
        rand_in = jnp.full((H, T, 1), -1, dtype=jnp.int32)
        nr = 1
    else:
        rand_in = rand_cols.astype(jnp.int32)

    kernel = functools.partial(
        bigbird_attn_kernel, num_heads=H, head_size=hs,
        window_size=window_size, num_global_tokens=num_global_tokens,
        num_random_tokens=nr, seq_len=T)

    return pl.pallas_call(
        kernel,
        out_shape=jax.ShapeDtypeStruct((B, T, C), jnp.bfloat16),
        grid=(B,),
        in_specs=[
            pl.BlockSpec((1, T, C), lambda b: (b, 0, 0)),      # x (bf16)
            pl.BlockSpec((C, 3 * C), lambda b: (0, 0)),        # fused Wqkv^T
            pl.BlockSpec((H, T, nr), lambda b: (0, 0, 0)),     # random cols
            pl.BlockSpec((H, hs, C), lambda b: (0, 0, 0)),     # Wproj^T blocks
            pl.BlockSpec((1, C), lambda b: (0, 0)),            # bproj
        ],
        out_specs=pl.BlockSpec((1, T, C), lambda b: (b, 0, 0)),
        compiler_params=pltpu.CompilerParams(
            dimension_semantics=("parallel",)),
    )(x_bf, wqkv, rand_in, wpb, bp_f32)


# --------------------- random-column table & reference ----------------------

def build_random_cols(key, T, num_heads, num_random_tokens):
    nr = min(num_random_tokens, T)
    cols = []
    for h in range(num_heads):
        hkey = jax.random.fold_in(key, h)
        cols.append(jax.random.randint(hkey, (T, nr), 0, T, dtype=jnp.int32))
    return jnp.stack(cols, axis=0)                            # (H, T, nr)


def reference(x, wq, wk, wv, rand_cols, wp, bp, *, head_size, window_size,
              num_global_tokens):
    """Pure-JAX f32 replica of the PyTorch forward (eval mode, dropout=0)."""
    H = wq.shape[0]
    B, T, C = x.shape
    rows = jnp.arange(T)[:, None]
    cols = jnp.arange(T)[None, :]
    causal = rows >= cols
    local = (cols >= rows - window_size + 1) & (cols <= rows)
    glob = (rows < num_global_tokens) | (cols < num_global_tokens)
    nr = rand_cols.shape[-1]
    row_sel = jnp.repeat(jnp.arange(T), nr).reshape(T, nr)

    outs = []
    for h in range(H):
        q = x @ wq[h].T
        k = x @ wk[h].T
        v = x @ wv[h].T
        w = (q @ jnp.swapaxes(k, -1, -2)) * head_size ** (-0.5)
        rand = jnp.zeros((T, T), bool).at[row_sel, rand_cols[h]].set(True)
        keep = (local | glob | rand) & causal
        w = jnp.where(keep[None], w, -jnp.inf)
        w = jax.nn.softmax(w, axis=-1)
        outs.append(w @ v)
    cat = jnp.concatenate(outs, axis=-1)
    return cat @ wp.T + bp[0]


# ---------------------------------- main -------------------------------------

if __name__ == "__main__":
    B, T = 2, 8
    n_embd = 32
    num_heads = 4
    head_size = n_embd // num_heads
    window_size = 2
    num_global_tokens = 1
    num_random_tokens = 2
    # dropout = 0.0 -> identity

    key = jax.random.PRNGKey(0)
    kx, kq, kk, kv, kp, kb, km = jax.random.split(key, 7)

    x = jax.random.normal(kx, (B, T, n_embd), dtype=jnp.float32)
    # nn.Linear weight shapes: (out_features, in_features)
    wq = 0.1 * jax.random.normal(kq, (num_heads, head_size, n_embd), jnp.float32)
    wk = 0.1 * jax.random.normal(kk, (num_heads, head_size, n_embd), jnp.float32)
    wv = 0.1 * jax.random.normal(kv, (num_heads, head_size, n_embd), jnp.float32)
    wp = 0.1 * jax.random.normal(kp, (n_embd, n_embd), jnp.float32)
    bp = 0.1 * jax.random.normal(kb, (1, n_embd), jnp.float32)

    rand_cols = build_random_cols(km, T, num_heads, num_random_tokens)

    out = bigbird_attention(
        x, wq, wk, wv, rand_cols, wp, bp,
        num_heads=num_heads, head_size=head_size, window_size=window_size,
        num_global_tokens=num_global_tokens,
        num_random_tokens=num_random_tokens)
    out = jax.block_until_ready(out)

    ref = reference(x, wq, wk, wv, rand_cols, wp, bp, head_size=head_size,
                    window_size=window_size,
                    num_global_tokens=num_global_tokens)

    out_f32 = out.astype(jnp.float32)
    assert out.shape == (B, T, n_embd)
    assert jnp.allclose(out_f32, ref, atol=2e-2, rtol=2e-2), (
        f"max abs diff {jnp.max(jnp.abs(out_f32 - ref))}")

    print("KERNEL_OK")
</pallas_src>

<mosaic_0001>
module attributes {stable_mosaic.version = 11 : i64} {
  func.func @bigbird_attn_kernel(%arg0: i32, %arg1: memref<1x8x32xbf16, #tpu.memory_space<vmem>>, %arg2: memref<32x96xbf16, #tpu.memory_space<vmem>>, %arg3: memref<4x8x2xi32, #tpu.memory_space<vmem>>, %arg4: memref<4x8x32xbf16, #tpu.memory_space<vmem>>, %arg5: memref<1x32xf32, #tpu.memory_space<vmem>>, %arg6: memref<1x8x32xbf16, #tpu.memory_space<vmem>>) attributes {dimension_semantics = [#tpu.dimension_semantics<parallel>], iteration_bounds = array<i64: 2>, scalar_prefetch = 0 : i64, scratch_operands = 0 : i64, tpu.core_type = #tpu.core_type<tc>, window_params = [{transform_indices = @transform_0, window_bounds = array<i64: 1, 8, 32>}, {pipeline_mode = #tpu.pipeline_mode<synchronous>, transform_indices = @transform_1, window_bounds = array<i64: 32, 96>}, {pipeline_mode = #tpu.pipeline_mode<synchronous>, transform_indices = @transform_2, window_bounds = array<i64: 4, 8, 2>}, {pipeline_mode = #tpu.pipeline_mode<synchronous>, transform_indices = @transform_3, window_bounds = array<i64: 4, 8, 32>}, {pipeline_mode = #tpu.pipeline_mode<synchronous>, transform_indices = @transform_4, window_bounds = array<i64: 1, 32>}, {transform_indices = @transform_5, window_bounds = array<i64: 1, 8, 32>}]} {
    %c0 = arith.constant 0 : index
    %c0_0 = arith.constant 0 : index
    %c0_1 = arith.constant 0 : index
    %0 = vector.load %arg1[%c0, %c0_0, %c0_1] : memref<1x8x32xbf16, #tpu.memory_space<vmem>>, vector<1x8x32xbf16>
    %1 = vector.shape_cast %0 : vector<1x8x32xbf16> to vector<8x32xbf16>
    %c0_2 = arith.constant 0 : index
    %c0_3 = arith.constant 0 : index
    %2 = vector.load %arg2[%c0_2, %c0_3] : memref<32x96xbf16, #tpu.memory_space<vmem>>, vector<32x96xbf16>
    %cst = arith.constant dense<0.000000e+00> : vector<8x96xf32>
    %3 = tpu.matmul %1, %2, %cst {dimension_numbers = #tpu.dot_dimension_numbers<[1], [0], [0], [1], [0, 0, 1, 1], [], []>} : vector<8x32xbf16>, vector<32x96xbf16>, vector<8x96xf32> -> vector<8x96xf32>
    %4 = vector.shape_cast %3 : vector<8x96xf32> to vector<8x12x8xf32>
    %5 = tpu.transpose %4, [1, 0, 2] : vector<8x12x8xf32> -> vector<12x8x8xf32>
    %6 = arith.truncf %5 : vector<12x8x8xf32> to vector<12x8x8xbf16>
    %7 = vector.extract_strided_slice %6 {offsets = [0, 0, 0], sizes = [4, 8, 8], strides = [1, 1, 1]} : vector<12x8x8xbf16> to vector<4x8x8xbf16>
    %8 = vector.extract_strided_slice %6 {offsets = [4, 0, 0], sizes = [4, 8, 8], strides = [1, 1, 1]} : vector<12x8x8xbf16> to vector<4x8x8xbf16>
    %9 = vector.extract_strided_slice %6 {offsets = [8, 0, 0], sizes = [4, 8, 8], strides = [1, 1, 1]} : vector<12x8x8xbf16> to vector<4x8x8xbf16>
    "tpu.trace_start"() <{level = 10 : i32, message = "hqd,hkd->hqk"}> : () -> ()
    %cst_4 = arith.constant dense<0.000000e+00> : vector<4x8x8xf32>
    %10 = tpu.matmul %7, %8, %cst_4 {dimension_numbers = #tpu.dot_dimension_numbers<[2], [2], [1], [1], [0, 0, 0, 1, 1, 1], [0], [0]>} : vector<4x8x8xbf16>, vector<4x8x8xbf16>, vector<4x8x8xf32> -> vector<4x8x8xf32>
    "tpu.trace_stop"() : () -> ()
    %11 = tpu.iota {dimensions = array<i32: 0>} : vector<8x8xi32>
    %12 = tpu.iota {dimensions = array<i32: 1>} : vector<8x8xi32>
    %13 = arith.cmpi sge, %11, %12 : vector<8x8xi32>
    %c2_i32 = arith.constant 2 : i32
    %14 = vector.broadcast %c2_i32 : i32 to vector<8x8xi32>
    %15 = arith.subi %11, %14 : vector<8x8xi32>
    %c1_i32 = arith.constant 1 : i32
    %16 = vector.broadcast %c1_i32 : i32 to vector<8x8xi32>
    %17 = arith.addi %15, %16 : vector<8x8xi32>
    %18 = arith.cmpi sge, %12, %17 : vector<8x8xi32>
    %19 = arith.cmpi sle, %12, %11 : vector<8x8xi32>
    %20 = arith.andi %18, %19 : vector<8x8xi1>
    %c1_i32_5 = arith.constant 1 : i32
    %21 = vector.broadcast %c1_i32_5 : i32 to vector<8x8xi32>
    %22 = arith.cmpi slt, %11, %21 : vector<8x8xi32>
    %c1_i32_6 = arith.constant 1 : i32
    %23 = vector.broadcast %c1_i32_6 : i32 to vector<8x8xi32>
    %24 = arith.cmpi slt, %12, %23 : vector<8x8xi32>
    %25 = arith.ori %22, %24 : vector<8x8xi1>
    %26 = arith.ori %20, %25 : vector<8x8xi1>
    %c0_7 = arith.constant 0 : index
    %c0_8 = arith.constant 0 : index
    %c0_9 = arith.constant 0 : index
    %27 = vector.load %arg3[%c0_7, %c0_8, %c0_9] : memref<4x8x2xi32, #tpu.memory_space<vmem>>, vector<4x8x2xi32>
    %28 = vector.shape_cast %12 : vector<8x8xi32> to vector<1x8x8xi32>
    %29 = vector.extract_strided_slice %27 {offsets = [0, 0, 0], sizes = [4, 8, 1], strides = [1, 1, 1]} : vector<4x8x2xi32> to vector<4x8x1xi32>
    %30 = vector.broadcast %28 : vector<1x8x8xi32> to vector<4x8x8xi32>
    %31 = vector.broadcast %29 : vector<4x8x1xi32> to vector<4x8x8xi32>
    %32 = arith.cmpi eq, %30, %31 : vector<4x8x8xi32>
    %33 = vector.shape_cast %12 : vector<8x8xi32> to vector<1x8x8xi32>
    %34 = vector.extract_strided_slice %27 {offsets = [0, 0, 1], sizes = [4, 8, 1], strides = [1, 1, 1]} : vector<4x8x2xi32> to vector<4x8x1xi32>
    %35 = vector.broadcast %33 : vector<1x8x8xi32> to vector<4x8x8xi32>
    %36 = vector.broadcast %34 : vector<4x8x1xi32> to vector<4x8x8xi32>
    %37 = arith.cmpi eq, %35, %36 : vector<4x8x8xi32>
    %38 = arith.ori %32, %37 : vector<4x8x8xi1>
    %39 = vector.shape_cast %26 : vector<8x8xi1> to vector<1x8x8xi1>
    %40 = vector.broadcast %39 : vector<1x8x8xi1> to vector<4x8x8xi1>
    %41 = arith.ori %40, %38 : vector<4x8x8xi1>
    %42 = vector.shape_cast %13 : vector<8x8xi1> to vector<1x8x8xi1>
    %43 = vector.broadcast %42 : vector<1x8x8xi1> to vector<4x8x8xi1>
    %44 = arith.andi %41, %43 : vector<4x8x8xi1>
    %cst_10 = arith.constant -1.000000e+09 : f32
    %45 = vector.broadcast %cst_10 : f32 to vector<4x8x8xf32>
    %46 = arith.select %44, %10, %45 : vector<4x8x8xi1>, vector<4x8x8xf32>
    %cst_11 = arith.constant dense<0xFF800000> : vector<4x8xf32>
    %47 = vector.multi_reduction <maximumf>, %46, %cst_11 [2] : vector<4x8x8xf32> to vector<4x8xf32>
    %48 = vector.shape_cast %47 : vector<4x8xf32> to vector<4x8x1xf32>
    %49 = vector.broadcast %48 : vector<4x8x1xf32> to vector<4x8x8xf32>
    %50 = arith.subf %46, %49 : vector<4x8x8xf32>
    %51 = math.exp %50 : vector<4x8x8xf32>
    %cst_12 = arith.constant dense<0.000000e+00> : vector<4x8xf32>
    %52 = vector.multi_reduction <add>, %51, %cst_12 [2] : vector<4x8x8xf32> to vector<4x8xf32>
    %53 = vector.shape_cast %52 : vector<4x8xf32> to vector<4x8x1xf32>
    %54 = tpu.reciprocal %53 {approx = true} : vector<4x8x1xf32> -> vector<4x8x1xf32>
    %55 = vector.broadcast %54 : vector<4x8x1xf32> to vector<4x8x8xf32>
    %56 = arith.mulf %51, %55 : vector<4x8x8xf32>
    %57 = arith.truncf %56 : vector<4x8x8xf32> to vector<4x8x8xbf16>
    "tpu.trace_start"() <{level = 10 : i32, message = "hqk,hkd->hqd"}> : () -> ()
    %cst_13 = arith.constant dense<0.000000e+00> : vector<4x8x8xf32>
    %58 = tpu.matmul %57, %9, %cst_13 {dimension_numbers = #tpu.dot_dimension_numbers<[2], [1], [1], [2], [0, 0, 0, 1, 1, 2], [0], [0]>} : vector<4x8x8xbf16>, vector<4x8x8xbf16>, vector<4x8x8xf32> -> vector<4x8x8xf32>
    "tpu.trace_stop"() : () -> ()
    %59 = arith.truncf %58 : vector<4x8x8xf32> to vector<4x8x8xbf16>
    %c0_14 = arith.constant 0 : index
    %c0_15 = arith.constant 0 : index
    %c0_16 = arith.constant 0 : index
    %60 = vector.load %arg4[%c0_14, %c0_15, %c0_16] : memref<4x8x32xbf16, #tpu.memory_space<vmem>>, vector<4x8x32xbf16>
    "tpu.trace_start"() <{level = 10 : i32, message = "hqd,hdc->hqc"}> : () -> ()
    %cst_17 = arith.constant dense<0.000000e+00> : vector<4x8x32xf32>
    %61 = tpu.matmul %59, %60, %cst_17 {dimension_numbers = #tpu.dot_dimension_numbers<[2], [1], [1], [2], [0, 0, 0, 1, 1, 2], [0], [0]>} : vector<4x8x8xbf16>, vector<4x8x32xbf16>, vector<4x8x32xf32> -> vector<4x8x32xf32>
    "tpu.trace_stop"() : () -> ()
    %cst_18 = arith.constant dense<0.000000e+00> : vector<8x32xf32>
    %62 = vector.multi_reduction <add>, %61, %cst_18 [0] : vector<4x8x32xf32> to vector<8x32xf32>
    %c0_19 = arith.constant 0 : index
    %c0_20 = arith.constant 0 : index
    %63 = vector.load %arg5[%c0_19, %c0_20] : memref<1x32xf32, #tpu.memory_space<vmem>>, vector<1x32xf32>
    %64 = vector.broadcast %63 : vector<1x32xf32> to vector<8x32xf32>
    %65 = arith.addf %62, %64 : vector<8x32xf32>
    %66 = arith.truncf %65 : vector<8x32xf32> to vector<8x32xbf16>
    %c0_21 = arith.constant 0 : index
    %c0_22 = arith.constant 0 : index
    %c0_23 = arith.constant 0 : index
    %67 = vector.load %arg6[%c0_21, %c0_22, %c0_23] : memref<1x8x32xbf16, #tpu.memory_space<vmem>>, vector<1x8x32xbf16>
    %68 = vector.shape_cast %67 : vector<1x8x32xbf16> to vector<8x32xbf16>
    %69 = vector.shape_cast %66 : vector<8x32xbf16> to vector<1x8x32xbf16>
    tpu.vector_store %arg6[%c0_21, %c0_22, %c0_23], %69 {strides = array<i32>} : memref<1x8x32xbf16, #tpu.memory_space<vmem>>, vector<1x8x32xbf16>,
    return
  }
  func.func @transform_0(%arg0: i32) -> (i32, i32, i32) {
    %c0_i32 = arith.constant 0 : i32
    %c0_i32_0 = arith.constant 0 : i32
    %c0_i32_1 = arith.constant 0 : i32
    return %arg0, %c0_i32, %c0_i32_0 : i32, i32, i32
  }
  func.func @transform_1(%arg0: i32) -> (i32, i32) {
    %c0_i32 = arith.constant 0 : i32
    %c0_i32_0 = arith.constant 0 : i32
    %c0_i32_1 = arith.constant 0 : i32
    return %c0_i32, %c0_i32_0 : i32, i32
  }
  func.func @transform_2(%arg0: i32) -> (i32, i32, i32) {
    %c0_i32 = arith.constant 0 : i32
    %c0_i32_0 = arith.constant 0 : i32
    %c0_i32_1 = arith.constant 0 : i32
    %c0_i32_2 = arith.constant 0 : i32
    return %c0_i32, %c0_i32_0, %c0_i32_1 : i32, i32, i32
  }
  func.func @transform_3(%arg0: i32) -> (i32, i32, i32) {
    %c0_i32 = arith.constant 0 : i32
    %c0_i32_0 = arith.constant 0 : i32
    %c0_i32_1 = arith.constant 0 : i32
    %c0_i32_2 = arith.constant 0 : i32
    return %c0_i32, %c0_i32_0, %c0_i32_1 : i32, i32, i32
  }
  func.func @transform_4(%arg0: i32) -> (i32, i32) {
    %c0_i32 = arith.constant 0 : i32
    %c0_i32_0 = arith.constant 0 : i32
    %c0_i32_1 = arith.constant 0 : i32
    return %c0_i32, %c0_i32_0 : i32, i32
  }
  func.func @transform_5(%arg0: i32) -> (i32, i32, i32) {
    %c0_i32 = arith.constant 0 : i32
    %c0_i32_0 = arith.constant 0 : i32
    %c0_i32_1 = arith.constant 0 : i32
    return %arg0, %c0_i32, %c0_i32_0 : i32, i32, i32
  }
}

</mosaic_0001>

<llo_original>
// kernel: tpu_custom_call.1
$region0: #{tpu_custom_call.1}
  #allocation0 [shape = 'u32[]', space=smem, size = 0x4, offset = 0x4, fixed_abs, tag = 'smem constant byte address 0x4 - core index']
  #allocation1 [shape = 'u32[144,128]{1,0:T(1,128)}', space=vmem, size = 0x12000, scoped, tag = 'internal scratch']
  %s0 = inlined_call_operand.vmem [shape: bf16[2,8,32], index: 0, kind: input, shape index: {}]
  %s1 = inlined_call_operand.vmem [shape: bf16[32,96], index: 1, kind: input, shape index: {}]
  %s2 = inlined_call_operand.vmem [shape: s32[4,8,2], index: 2, kind: input, shape index: {}]
  %s3 = inlined_call_operand.vmem [shape: bf16[4,8,32], index: 3, kind: input, shape index: {}]
  %s4 = inlined_call_operand.vmem [shape: f32[1,32], index: 4, kind: input, shape index: {}]
  %s5 = inlined_call_operand.hbm [shape: bf16[2,8,32], index: 5, kind: output, shape index: {}]
  %s6 = sld [smem:[#allocation0]]
  $region53: #{tpu_custom_call.1} parent=0
    _
  %s8 = ssub.s32 1, %s6
  %s9 = scalar_select 0, %s8, %s6
  $region1: #{tpu_custom_call.1} parent=0
    #allocation2 [shape = 'u8[4096]{0}', space=vmem, size = 0x1000, scoped, tag = 'output window, operand 0']
    #allocation3 [shape = 's32[2]{0}', space=sflag, size = 0x8, scoped, tag = 'scoped memory for tpu_custom_call.1']
    %10 = vsyncpa [#allocation3], 0
    %s11 = scalar_lea.sflag [#allocation3], 1
    %12 = vsyncpa %s11, 0
    loop: start=0, step=1, limit=4
    $region2: #{tpu_custom_call.1} parent=1 // loop_pre_header
      _
    $region3: #{tpu_custom_call.1} parent=1 // loop_header
      %s14 = sphi 0, %s18
      %p15 = scmp.ge.s32.totalorder %s14, 4
      %s24 = sphi 0, %s26
      %s27 = sphi 0, %s24
      %s28 = sphi 0, %s27
      %s44 = sphi 0, %s28
      %s48 = sphi 0, %s48
      %s50 = sphi 0, %s48
      %s51 = sphi 0, %s50
      %s65 = sphi 0, %s51
      %s69 = sphi 0, %s69
      %s71 = sphi 0, %s69
      %s72 = sphi 0, %s71
      %s86 = sphi 0, %s72
      %s90 = sphi 0, %s90
      %s92 = sphi 0, %s90
      %s93 = sphi 0, %s92
      %s107 = sphi 0, %s93
      %s111 = sphi 0, %s111
      %s113 = sphi 0, %s111
      %s114 = sphi 0, %s113
      %s128 = sphi 0, %s114
      %s134 = sphi 0, %s136
      %s137 = sphi 0, %s134
      %s138 = sphi 0, %s137
      %s154 = sphi 0, %s138
    $region4: #{tpu_custom_call.1} parent=1 // loop_header_branch
      %17 = sbr.rel (%p15) target = $region8
    $region5: #{tpu_custom_call.1} parent=1 // loop_body
      %s19 = ssub.s32 %s14, 1
      %s20 = ssub.s32 %s14, 2
      %s21 = sadd.s32 %s14, 1
      %s22 = ssub.s32 %s14, %s21
      %p23 = scmp.eq.s32.totalorder %s22, 0
      %s25 = sadd.s32 %s24, 1
      %s26 = scalar_select %p23, %s24, %s25
      %p29 = pneg %p23
      %p30 = scmp.eq.s32.totalorder %s14, 1
      %p31 = por %p29, %p30
      %p32 = scmp.ne.s32.totalorder %s24, %s27
      %p33 = scmp.eq.s32.totalorder %s14, 0
      %p34 = por %p32, %p33
      %p35 = scmp.ne.s32.totalorder %s24, %s27
      %p36 = scmp.eq.s32.totalorder %s19, 1
      %p37 = por %p35, %p36
      %p38 = scmp.ne.s32.totalorder %s27, %s28
      %p39 = scmp.eq.s32.totalorder %s19, 0
      %p40 = por %p38, %p39
      %p41 = scmp.ne.s32.totalorder %s27, %s28
      %p42 = scmp.eq.s32.totalorder %s20, 1
      %p43 = por %p41, %p42
      %p45 = scmp.ne.s32.totalorder %s28, %s44
      %p46 = scmp.eq.s32.totalorder %s20, 0
      %p47 = por %p45, %p46
      %s49 = sadd.s32 %s48, 1
      %p52 = scmp.eq.s32.totalorder %s14, 1
      %p53 = scmp.ne.s32.totalorder %s48, %s50
      %p54 = scmp.eq.s32.totalorder %s14, 0
      %p55 = por %p53, %p54
      %p56 = scmp.ne.s32.totalorder %s48, %s50
      %p57 = scmp.eq.s32.totalorder %s19, 1
      %p58 = por %p56, %p57
      %p59 = scmp.ne.s32.totalorder %s50, %s51
      %p60 = scmp.eq.s32.totalorder %s19, 0
      %p61 = por %p59, %p60
      %p62 = scmp.ne.s32.totalorder %s50, %s51
      %p63 = scmp.eq.s32.totalorder %s20, 1
      %p64 = por %p62, %p63
      %p66 = scmp.ne.s32.totalorder %s51, %s65
      %p67 = scmp.eq.s32.totalorder %s20, 0
      %p68 = por %p66, %p67
      %s70 = sadd.s32 %s69, 1
      %p73 = scmp.eq.s32.totalorder %s14, 1
      %p74 = scmp.ne.s32.totalorder %s69, %s71
      %p75 = scmp.eq.s32.totalorder %s14, 0
      %p76 = por %p74, %p75
      %p77 = scmp.ne.s32.totalorder %s69, %s71
      %p78 = scmp.eq.s32.totalorder %s19, 1
      %p79 = por %p77, %p78
      %p80 = scmp.ne.s32.totalorder %s71, %s72
      %p81 = scmp.eq.s32.totalorder %s19, 0
      %p82 = por %p80, %p81
      %p83 = scmp.ne.s32.totalorder %s71, %s72
      %p84 = scmp.eq.s32.totalorder %s20, 1
      %p85 = por %p83, %p84
      %p87 = scmp.ne.s32.totalorder %s72, %s86
      %p88 = scmp.eq.s32.totalorder %s20, 0
      %p89 = por %p87, %p88
      %s91 = sadd.s32 %s90, 1
      %p94 = scmp.eq.s32.totalorder %s14, 1
      %p95 = scmp.ne.s32.totalorder %s90, %s92
      %p96 = scmp.eq.s32.totalorder %s14, 0
      %p97 = por %p95, %p96
      %p98 = scmp.ne.s32.totalorder %s90, %s92
      %p99 = scmp.eq.s32.totalorder %s19, 1
      %p100 = por %p98, %p99
      %p101 = scmp.ne.s32.totalorder %s92, %s93
      %p102 = scmp.eq.s32.totalorder %s19, 0
      %p103 = por %p101, %p102
      %p104 = scmp.ne.s32.totalorder %s92, %s93
      %p105 = scmp.eq.s32.totalorder %s20, 1
      %p106 = por %p104, %p105
      %p108 = scmp.ne.s32.totalorder %s93, %s107
      %p109 = scmp.eq.s32.totalorder %s20, 0
      %p110 = por %p108, %p109
      %s112 = sadd.s32 %s111, 1
      %p115 = scmp.eq.s32.totalorder %s14, 1
      %p116 = scmp.ne.s32.totalorder %s111, %s113
      %p117 = scmp.eq.s32.totalorder %s14, 0
      %p118 = por %p116, %p117
      %p119 = scmp.ne.s32.totalorder %s111, %s113
      %p120 = scmp.eq.s32.totalorder %s19, 1
      %p121 = por %p119, %p120
      %p122 = scmp.ne.s32.totalorder %s113, %s114
      %p123 = scmp.eq.s32.totalorder %s19, 0
      %p124 = por %p122, %p123
      %p125 = scmp.ne.s32.totalorder %s113, %s114
      %p126 = scmp.eq.s32.totalorder %s20, 1
      %p127 = por %p125, %p126
      %p129 = scmp.ne.s32.totalorder %s114, %s128
      %p130 = scmp.eq.s32.totalorder %s20, 0
      %p131 = por %p129, %p130
      %s132 = ssub.s32 %s14, %s21
      %p133 = scmp.eq.s32.totalorder %s132, 0
      %s135 = sadd.s32 %s134, 1
      %s136 = scalar_select %p133, %s134, %s135
      %p139 = pneg %p133
      %p140 = scmp.eq.s32.totalorder %s14, 1
      %p141 = por %p139, %p140
      %p142 = scmp.ne.s32.totalorder %s134, %s137
      %p143 = scmp.eq.s32.totalorder %s14, 0
      %p144 = por %p142, %p143
      %p145 = scmp.ne.s32.totalorder %s134, %s137
      %p146 = scmp.eq.s32.totalorder %s19, 1
      %p147 = por %p145, %p146
      %p148 = scmp.ne.s32.totalorder %s137, %s138
      %p149 = scmp.eq.s32.totalorder %s19, 0
      %p150 = por %p148, %p149
      %p151 = scmp.ne.s32.totalorder %s137, %s138
      %p152 = scmp.eq.s32.totalorder %s20, 1
      %p153 = por %p151, %p152
      %p155 = scmp.ne.s32.totalorder %s138, %s154
      %p156 = scmp.eq.s32.totalorder %s20, 0
      %p157 = por %p155, %p156
      %p158 = scmp.le.s32.totalorder 1, %s14
      %p159 = scmp.lt.s32.totalorder %s14, 3
      %p160 = pnand %p158, %p159
      %p161 = pneg %p160
      // Predicated region
      $region9: #{tpu_custom_call.1} parent=5 // pred_check
        _
      $region10: #{tpu_custom_call.1} parent=5 // pred_check_branch
        %163 = sbr.rel (%p160) target = $region12
      $region11: #{tpu_custom_call.1} parent=5 // pred_region
        %s164 = ssub.s32 %s14, 1
        // Predicated region
        $region13: #{tpu_custom_call.1} parent=11 // pred_check
          %p165 = pneg %p61
        $region14: #{tpu_custom_call.1} parent=11 // pred_check_branch
          %167 = sbr.rel (%p165) target = $region16
        $region15: #{tpu_custom_call.1} parent=11 // pred_region
          _
        $region16: #{tpu_custom_call.1} parent=11 // pred_fallthru
          _
        // Predicated region
        $region17: #{tpu_custom_call.1} parent=11 // pred_check
          %p168 = pneg %p82
        $region18: #{tpu_custom_call.1} parent=11 // pred_check_branch
          %170 = sbr.rel (%p168) target = $region20
        $region19: #{tpu_custom_call.1} parent=11 // pred_region
          _
        $region20: #{tpu_custom_call.1} parent=11 // pred_fallthru
          _
        // Predicated region
        $region21: #{tpu_custom_call.1} parent=11 // pred_check
          %p171 = pneg %p103
        $region22: #{tpu_custom_call.1} parent=11 // pred_check_branch
          %173 = sbr.rel (%p171) target = $region24
        $region23: #{tpu_custom_call.1} parent=11 // pred_region
          _
        $region24: #{tpu_custom_call.1} parent=11 // pred_fallthru
          _
        // Predicated region
        $region25: #{tpu_custom_call.1} parent=11 // pred_check
          %p174 = pneg %p124
        $region26: #{tpu_custom_call.1} parent=11 // pred_check_branch
          %176 = sbr.rel (%p174) target = $region28
        $region27: #{tpu_custom_call.1} parent=11 // pred_region
          _
        $region28: #{tpu_custom_call.1} parent=11 // pred_fallthru
          _
      $region12: #{tpu_custom_call.1} parent=5 // pred_fallthru
        _
      %p177 = scmp.lt.s32.totalorder %s14, 2
      // Predicated region
      $region29: #{tpu_custom_call.1} parent=5 // pred_check
        %p178 = pneg %p177
      $region30: #{tpu_custom_call.1} parent=5 // pred_check_branch
        %180 = sbr.rel (%p178) target = $region32
      $region31: #{tpu_custom_call.1} parent=5 // pred_region
        // Predicated region
        $region33: #{tpu_custom_call.1} parent=31 // pred_check
          %p181 = pneg %p34
        $region34: #{tpu_custom_call.1} parent=31 // pred_check_branch
          %183 = sbr.rel (%p181) target = $region36
        $region35: #{tpu_custom_call.1} parent=31 // pred_region
          %p184 = scmp.lt.s32.totalorder %s14, 1
          %s185 = scalar_select %p184, %s14, 1
          %s186 = smul.addr %s185, 4
          %s187 = scalar_lea.vmem %s0, %s186
        $region36: #{tpu_custom_call.1} parent=31 // pred_fallthru
          _
      $region32: #{tpu_custom_call.1} parent=5 // pred_fallthru
        _
      %p188 = scmp.le.s32.totalorder 1, %s14
      %p189 = scmp.lt.s32.totalorder %s14, 3
      %p190 = pnand %p188, %p189
      %p191 = pneg %p190
      // Predicated region
      $region37: #{tpu_custom_call.1} parent=5 // pred_check
        _
      $region38: #{tpu_custom_call.1} parent=5 // pred_check_branch
        %193 = sbr.rel (%p190) target = $region40
      $region39: #{tpu_custom_call.1} parent=5 // pred_region
        %s194 = ssub.s32 %s14, 1
        %p195 = scmp.lt.s32.totalorder %s19, 1
        %s196 = scalar_select %p195, %s19, 1
        %s197 = smul.addr %s196, 4
        %s198 = scalar_lea.vmem %s0, %s197
        %p199 = pneg %p40
        %p200 = pneg %p37
        %p201 = pneg %p61
        %p202 = pneg %p58
        %p203 = pneg %p82
        %p204 = pneg %p79
        %p205 = pneg %p103
        %p206 = pneg %p100
        %p207 = pneg %p124
        %p208 = pneg %p121
        %p209 = pneg %p150
        %p210 = pneg %p147
        %s211 = sand.u32 %s137, 1
        %s212 = scalar_lea.sflag [#allocation3], %s211
        %s213 = sand.u32 %s137, 1
        %s214 = smul.addr %s213, 4
        %s215 = scalar_lea.vmem [#allocation2], %s214
        %p216 = scmp.lt.s32.totalorder %s19, 1
        %s217 = scalar_select %p216, %s19, 1
        %s218 = smul.addr %s217, 4
        %s219 = scalar_lea.vmem %s0, %s218
        %v221 = vld [vmem:[%s219] sm:$0xf]
        %v222 = vld [vmem:[%s1] sm:$0xf]
        %v223 = vld [vmem:[%s1 + $0x4] sm:$0xf]
        %v224 = vld [vmem:[%s1 + $0x8] sm:$0xf]
        %v225 = vld [vmem:[%s1 + $0xc] sm:$0xf]
        %v230 = vunpack.c.l.b16 %v222
        %v231 = vunpack.c.l.b16 %v223
        %v232 = vunpack.c.l.b16 %v224
        %v233 = vunpack.c.l.b16 %v225
        %v234 = vpack.c.b16 %v231, %v230
        %v235 = vpack.c.b16 %v233, %v232
        %vm238 = vcmask 261120
        %v240 = vsel %vm238, %v221, 0
        %242 = vmatprep.subr.bf16.mxu0 0
        %243 = vmatpush1.bf16.msra.mxu0 %v234
        %244 = vmatprep.subr.bf16.mxu0 0
        %245 = vmatpush1.bf16.msra.mxu0 %v235
        %246 = vmatprep.subr.bf16.mxu0 0
        %247 = vmatpush1.bf16.msra.mxu0 0
        %248 = vmatprep.subr.bf16.mxu0 0
        %249 = vmatpush1.bf16.msra.mxu0 0
        %250 = vmatprep.subr.bf16.mxu0 0
        %251 = vmatpush1.bf16.msra.mxu0 0
        %252 = vmatprep.subr.bf16.mxu0 0
        %253 = vmatpush1.bf16.msra.mxu0 0
        %254 = vmatprep.subr.bf16.mxu0 0
        %255 = vmatpush1.bf16.msra.mxu0 0
        %256 = vmatprep.subr.bf16.mxu0 0
        %257 = vmatpush1.bf16.msra.mxu0 0
        %258 = vmatprep.subr.bf16.mxu0 0
        %259 = vmatpush1.bf16.msra.mxu0 0
        %260 = vmatprep.subr.bf16.mxu0 0
        %261 = vmatpush1.bf16.msra.mxu0 0
        %262 = vmatprep.subr.bf16.mxu0 0
        %263 = vmatpush1.bf16.msra.mxu0 0
        %264 = vmatprep.subr.bf16.mxu0 0
        %265 = vmatpush1.bf16.msra.mxu0 0
        %266 = vmatprep.subr.bf16.mxu0 0
        %267 = vmatpush1.bf16.msra.mxu0 0
        %268 = vmatprep.subr.bf16.mxu0 0
        %269 = vmatpush1.bf16.msra.mxu0 0
        %270 = vmatprep.subr.bf16.mxu0 0
        %271 = vmatpush1.bf16.msra.mxu0 0
        %272 = vmatprep.subr.bf16.mxu0 0
        %273 = vmatpush1.bf16.msra.mxu0 0
        %274 = vmatprep.mubr.bf16.mxu0 0
        %275 = vmatmul.mubr.bf16.gmra.mrb[0].mxu0 %v240
        %v276 = vpop.f32.mrb[0].mxu0
        %v277 = vadd.f32 0.0, %v276
        %v278 = vpop.f32.mrb[0].mxu0
        %v279 = vpop.f32.mrb[0].mxu0
        %v280 = vpop.f32.mrb[0].mxu0
        %281 = vdwg.mxu0
        %283 = vrot.lane.b32.xlu0 %v277, 120
        %v284 = vpop.permute.xlu0 %283
        %286 = vrot.lane.b32.xlu0 %v277, 112
        %v287 = vpop.permute.xlu0 %286
        %289 = vrot.lane.b32.xlu0 %v277, 104
        %v290 = vpop.permute.xlu0 %289
        %292 = vrot.lane.b32.xlu0 %v277, 96
        %v293 = vpop.permute.xlu0 %292
        %295 = vrot.lane.b32.xlu0 %v277, 88
        %v296 = vpop.permute.xlu0 %295
        %298 = vrot.lane.b32.xlu0 %v277, 80
        %v299 = vpop.permute.xlu0 %298
        %301 = vrot.lane.b32.xlu0 %v277, 72
        %v302 = vpop.permute.xlu0 %301
        %304 = vrot.lane.b32.xlu0 %v277, 64
        %v305 = vpop.permute.xlu0 %304
        %307 = vrot.lane.b32.xlu0 %v277, 56
        %v308 = vpop.permute.xlu0 %307
        %310 = vrot.lane.b32.xlu0 %v277, 48
        %v311 = vpop.permute.xlu0 %310
        %313 = vrot.lane.b32.xlu0 %v277, 40
        %v314 = vpop.permute.xlu0 %313
        %v316 = vcombine.low %v277, %v287
        %v317 = vcombine.high %v277, %v287
        %v319 = vunpack.c.l.s4 1983009808
        %v320 = vunpack.c.0.s8 %v319
        %v321 = vlaneseq
        %v322 = vshrl.u32 %v321, 7
        %v323 = vsub.s32 %v320, %v322
        %v324 = vrot.slane %v316, %v323
        %v326 = vunpack.c.l.s4 1983009808
        %v327 = vunpack.c.0.s8 %v326
        %v328 = vlaneseq
        %v329 = vshrl.u32 %v328, 7
        %v330 = vsub.s32 %v327, %v329
        %v331 = vrot.slane %v317, %v330
        %v332 = vcombine.low %v284, %v290
        %v333 = vcombine.high %v284, %v290
        %v335 = vunpack.c.l.s4 1983009808
        %v336 = vunpack.c.0.s8 %v335
        %v337 = vlaneseq
        %v338 = vshrl.u32 %v337, 7
        %v339 = vsub.s32 %v336, %v338
        %v340 = vrot.slane %v332, %v339
        %v342 = vunpack.c.l.s4 1983009808
        %v343 = vunpack.c.0.s8 %v342
        %v344 = vlaneseq
        %v345 = vshrl.u32 %v344, 7
        %v346 = vsub.s32 %v343, %v345
        %v347 = vrot.slane %v333, %v346
        %v348 = vcombine.low %v293, %v299
        %v349 = vcombine.high %v293, %v299
        %v351 = vunpack.c.l.s4 1983009808
        %v352 = vunpack.c.0.s8 %v351
        %v353 = vlaneseq
        %v354 = vshrl.u32 %v353, 7
        %v355 = vsub.s32 %v352, %v354
        %v356 = vrot.slane %v348, %v355
        %v358 = vunpack.c.l.s4 1983009808
        %v359 = vunpack.c.0.s8 %v358
        %v360 = vlaneseq
        %v361 = vshrl.u32 %v360, 7
        %v362 = vsub.s32 %v359, %v361
        %v363 = vrot.slane %v349, %v362
        %v364 = vcombine.low %v296, %v302
        %v365 = vcombine.high %v296, %v302
        %v367 = vunpack.c.l.s4 1983009808
        %v368 = vunpack.c.0.s8 %v367
        %v369 = vlaneseq
        %v370 = vshrl.u32 %v369, 7
        %v371 = vsub.s32 %v368, %v370
        %v372 = vrot.slane %v364, %v371
        %v374 = vunpack.c.l.s4 1983009808
        %v375 = vunpack.c.0.s8 %v374
        %v376 = vlaneseq
        %v377 = vshrl.u32 %v376, 7
        %v378 = vsub.s32 %v375, %v377
        %v379 = vrot.slane %v365, %v378
        %v380 = vcombine.low %v324, %v340
        %v381 = vcombine.high %v324, %v340
        %v383 = vunpack.c.l.s4 1934713408
        %v384 = vunpack.c.0.s8 %v383
        %v385 = vlaneseq
        %v386 = vshrl.u32 %v385, 7
        %v387 = vsub.s32 %v384, %v386
        %v388 = vrot.slane %v380, %v387
        %v390 = vunpack.c.l.s4 1934713408
        %v391 = vunpack.c.0.s8 %v390
        %v392 = vlaneseq
        %v393 = vshrl.u32 %v392, 7
        %v394 = vsub.s32 %v391, %v393
        %v395 = vrot.slane %v381, %v394
        %v396 = vcombine.low %v331, %v347
        %v397 = vcombine.high %v331, %v347
        %v399 = vunpack.c.l.s4 1934713408
        %v400 = vunpack.c.0.s8 %v399
        %v401 = vlaneseq
        %v402 = vshrl.u32 %v401, 7
        %v403 = vsub.s32 %v400, %v402
        %v404 = vrot.slane %v396, %v403
        %v406 = vunpack.c.l.s4 1934713408
        %v407 = vunpack.c.0.s8 %v406
        %v408 = vlaneseq
        %v409 = vshrl.u32 %v408, 7
        %v410 = vsub.s32 %v407, %v409
        %v411 = vrot.slane %v397, %v410
        %v412 = vcombine.low %v356, %v372
        %v413 = vcombine.high %v356, %v372
        %v415 = vunpack.c.l.s4 1934713408
        %v416 = vunpack.c.0.s8 %v415
        %v417 = vlaneseq
        %v418 = vshrl.u32 %v417, 7
        %v419 = vsub.s32 %v416, %v418
        %v420 = vrot.slane %v412, %v419
        %v422 = vunpack.c.l.s4 1934713408
        %v423 = vunpack.c.0.s8 %v422
        %v424 = vlaneseq
        %v425 = vshrl.u32 %v424, 7
        %v426 = vsub.s32 %v423, %v425
        %v427 = vrot.slane %v413, %v426
        %v428 = vcombine.low %v363, %v379
        %v429 = vcombine.high %v363, %v379
        %v431 = vunpack.c.l.s4 1934713408
        %v432 = vunpack.c.0.s8 %v431
        %v433 = vlaneseq
        %v434 = vshrl.u32 %v433, 7
        %v435 = vsub.s32 %v432, %v434
        %v436 = vrot.slane %v428, %v435
        %v438 = vunpack.c.l.s4 1934713408
        %v439 = vunpack.c.0.s8 %v438
        %v440 = vlaneseq
        %v441 = vshrl.u32 %v440, 7
        %v442 = vsub.s32 %v439, %v441
        %v443 = vrot.slane %v429, %v442
        %v444 = vcombine.low %v388, %v420
        %v445 = vcombine.high %v388, %v420
        %v446 = vcombine.low %v395, %v427
        %v447 = vcombine.high %v395, %v427
        %v448 = vcombine.low %v404, %v436
        %v449 = vcombine.high %v404, %v436
        %v450 = vcombine.low %v411, %v443
        %v451 = vcombine.high %v411, %v443
        %v452 = vcombine.low %v305, %v311
        %v453 = vcombine.high %v305, %v311
        %v455 = vunpack.c.l.s4 1983009808
        %v456 = vunpack.c.0.s8 %v455
        %v457 = vlaneseq
        %v458 = vshrl.u32 %v457, 7
        %v459 = vsub.s32 %v456, %v458
        %v460 = vrot.slane %v452, %v459
        %v462 = vunpack.c.l.s4 1983009808
        %v463 = vunpack.c.0.s8 %v462
        %v464 = vlaneseq
        %v465 = vshrl.u32 %v464, 7
        %v466 = vsub.s32 %v463, %v465
        %v467 = vrot.slane %v453, %v466
        %v468 = vcombine.low %v308, %v314
        %v469 = vcombine.high %v308, %v314
        %v471 = vunpack.c.l.s4 1983009808
        %v472 = vunpack.c.0.s8 %v471
        %v473 = vlaneseq
        %v474 = vshrl.u32 %v473, 7
        %v475 = vsub.s32 %v472, %v474
        %v476 = vrot.slane %v468, %v475
        %v478 = vunpack.c.l.s4 1983009808
        %v479 = vunpack.c.0.s8 %v478
        %v480 = vlaneseq
        %v481 = vshrl.u32 %v480, 7
        %v482 = vsub.s32 %v479, %v481
        %v483 = vrot.slane %v469, %v482
        %v484 = vcombine.low %v460, %v476
        %v485 = vcombine.high %v460, %v476
        %v487 = vunpack.c.l.s4 1934713408
        %v488 = vunpack.c.0.s8 %v487
        %v489 = vlaneseq
        %v490 = vshrl.u32 %v489, 7
        %v491 = vsub.s32 %v488, %v490
        %v492 = vrot.slane %v484, %v491
        %v494 = vunpack.c.l.s4 1934713408
        %v495 = vunpack.c.0.s8 %v494
        %v496 = vlaneseq
        %v497 = vshrl.u32 %v496, 7
        %v498 = vsub.s32 %v495, %v497
        %v499 = vrot.slane %v485, %v498
        %v500 = vcombine.low %v467, %v483
        %v501 = vcombine.high %v467, %v483
        %v503 = vunpack.c.l.s4 1934713408
        %v504 = vunpack.c.0.s8 %v503
        %v505 = vlaneseq
        %v506 = vshrl.u32 %v505, 7
        %v507 = vsub.s32 %v504, %v506
        %v508 = vrot.slane %v500, %v507
        %v510 = vunpack.c.l.s4 1934713408
        %v511 = vunpack.c.0.s8 %v510
        %v512 = vlaneseq
        %v513 = vshrl.u32 %v512, 7
        %v514 = vsub.s32 %v511, %v513
        %v515 = vrot.slane %v501, %v514
        %v516 = vcombine.high %v492, 0.0
        %v517 = vcombine.high %v499, 0.0
        %v518 = vcombine.high %v508, 0.0
        %v519 = vcombine.high %v515, 0.0
        %v520 = vcombine.low %v444, %v446
        %v521 = vcombine.high %v444, %v446
        %v523 = vunpack.c.l.s4 1983009808
        %v524 = vunpack.c.0.s8 %v523
        %v525 = vlaneseq
        %v526 = vshrl.u32 %v525, 7
        %v527 = vsub.s32 %v524, %v526
        %v528 = vrot.slane %v520, %v527
        %v530 = vunpack.c.l.s4 1983009808
        %v531 = vunpack.c.0.s8 %v530
        %v532 = vlaneseq
        %v533 = vshrl.u32 %v532, 7
        %v534 = vsub.s32 %v531, %v533
        %v535 = vrot.slane %v521, %v534
        %v536 = vcombine.low %v445, %v447
        %v537 = vcombine.high %v445, %v447
        %v539 = vunpack.c.l.s4 1983009808
        %v540 = vunpack.c.0.s8 %v539
        %v541 = vlaneseq
        %v542 = vshrl.u32 %v541, 7
        %v543 = vsub.s32 %v540, %v542
        %v544 = vrot.slane %v536, %v543
        %v546 = vunpack.c.l.s4 1983009808
        %v547 = vunpack.c.0.s8 %v546
        %v548 = vlaneseq
        %v549 = vshrl.u32 %v548, 7
        %v550 = vsub.s32 %v547, %v549
        %v551 = vrot.slane %v537, %v550
        %v552 = vcombine.low %v448, %v450
        %v553 = vcombine.high %v448, %v450
        %v555 = vunpack.c.l.s4 1983009808
        %v556 = vunpack.c.0.s8 %v555
        %v557 = vlaneseq
        %v558 = vshrl.u32 %v557, 7
        %v559 = vsub.s32 %v556, %v558
        %v560 = vrot.slane %v552, %v559
        %v562 = vunpack.c.l.s4 1983009808
        %v563 = vunpack.c.0.s8 %v562
        %v564 = vlaneseq
        %v565 = vshrl.u32 %v564, 7
        %v566 = vsub.s32 %v563, %v565
        %v567 = vrot.slane %v553, %v566
        %v568 = vcombine.low %v449, %v451
        %v569 = vcombine.high %v449, %v451
        %v571 = vunpack.c.l.s4 1983009808
        %v572 = vunpack.c.0.s8 %v571
        %v573 = vlaneseq
        %v574 = vshrl.u32 %v573, 7
        %v575 = vsub.s32 %v572, %v574
        %v576 = vrot.slane %v568, %v575
        %v578 = vunpack.c.l.s4 1983009808
        %v579 = vunpack.c.0.s8 %v578
        %v580 = vlaneseq
        %v581 = vshrl.u32 %v580, 7
        %v582 = vsub.s32 %v579, %v581
        %v583 = vrot.slane %v569, %v582
        %v584 = vcombine.low %v528, %v544
        %v585 = vcombine.high %v528, %v544
        %v587 = vunpack.c.l.s4 1934713408
        %v588 = vunpack.c.0.s8 %v587
        %v589 = vlaneseq
        %v590 = vshrl.u32 %v589, 7
        %v591 = vsub.s32 %v588, %v590
        %v592 = vrot.slane %v584, %v591
        %v594 = vunpack.c.l.s4 1934713408
        %v595 = vunpack.c.0.s8 %v594
        %v596 = vlaneseq
        %v597 = vshrl.u32 %v596, 7
        %v598 = vsub.s32 %v595, %v597
        %v599 = vrot.slane %v585, %v598
        %v600 = vcombine.low %v535, %v551
        %v601 = vcombine.high %v535, %v551
        %v603 = vunpack.c.l.s4 1934713408
        %v604 = vunpack.c.0.s8 %v603
        %v605 = vlaneseq
        %v606 = vshrl.u32 %v605, 7
        %v607 = vsub.s32 %v604, %v606
        %v608 = vrot.slane %v600, %v607
        %v610 = vunpack.c.l.s4 1934713408
        %v611 = vunpack.c.0.s8 %v610
        %v612 = vlaneseq
        %v613 = vshrl.u32 %v612, 7
        %v614 = vsub.s32 %v611, %v613
        %v615 = vrot.slane %v601, %v614
        %v616 = vcombine.low %v560, %v576
        %v617 = vcombine.high %v560, %v576
        %v619 = vunpack.c.l.s4 1934713408
        %v620 = vunpack.c.0.s8 %v619
        %v621 = vlaneseq
        %v622 = vshrl.u32 %v621, 7
        %v623 = vsub.s32 %v620, %v622
        %v624 = vrot.slane %v616, %v623
        %v626 = vunpack.c.l.s4 1934713408
        %v627 = vunpack.c.0.s8 %v626
        %v628 = vlaneseq
        %v629 = vshrl.u32 %v628, 7
        %v630 = vsub.s32 %v627, %v629
        %v631 = vrot.slane %v617, %v630
        %v632 = vcombine.low %v567, %v583
        %v633 = vcombine.high %v567, %v583
        %v635 = vunpack.c.l.s4 1934713408
        %v636 = vunpack.c.0.s8 %v635
        %v637 = vlaneseq
        %v638 = vshrl.u32 %v637, 7
        %v639 = vsub.s32 %v636, %v638
        %v640 = vrot.slane %v632, %v639
        %v642 = vunpack.c.l.s4 1934713408
        %v643 = vunpack.c.0.s8 %v642
        %v644 = vlaneseq
        %v645 = vshrl.u32 %v644, 7
        %v646 = vsub.s32 %v643, %v645
        %v647 = vrot.slane %v633, %v646
        %v648 = vcombine.low %v592, %v624
        %v649 = vcombine.high %v592, %v624
        %v650 = vcombine.low %v599, %v631
        %v651 = vcombine.high %v599, %v631
        %v652 = vcombine.low %v608, %v640
        %v653 = vcombine.high %v608, %v640
        %v654 = vcombine.low %v615, %v647
        %v655 = vcombine.high %v615, %v647
        %v656 = vcombine.low %v492, %v499
        %v658 = vunpack.c.l.s4 1983009808
        %v659 = vunpack.c.0.s8 %v658
        %v660 = vlaneseq
        %v661 = vshrl.u32 %v660, 7
        %v662 = vsub.s32 %v659, %v661
        %v663 = vrot.slane %v656, %v662
        %v664 = vcombine.low %v516, %v517
        %v666 = vunpack.c.l.s4 1983009808
        %v667 = vunpack.c.0.s8 %v666
        %v668 = vlaneseq
        %v669 = vshrl.u32 %v668, 7
        %v670 = vsub.s32 %v667, %v669
        %v671 = vrot.slane %v664, %v670
        %v672 = vcombine.low %v508, %v515
        %v674 = vunpack.c.l.s4 1983009808
        %v675 = vunpack.c.0.s8 %v674
        %v676 = vlaneseq
        %v677 = vshrl.u32 %v676, 7
        %v678 = vsub.s32 %v675, %v677
        %v679 = vrot.slane %v672, %v678
        %v680 = vcombine.low %v518, %v519
        %v682 = vunpack.c.l.s4 1983009808
        %v683 = vunpack.c.0.s8 %v682
        %v684 = vlaneseq
        %v685 = vshrl.u32 %v684, 7
        %v686 = vsub.s32 %v683, %v685
        %v687 = vrot.slane %v680, %v686
        %v688 = vcombine.low %v663, %v671
        %v689 = vcombine.high %v663, %v671
        %v691 = vunpack.c.l.s4 1934713408
        %v692 = vunpack.c.0.s8 %v691
        %v693 = vlaneseq
        %v694 = vshrl.u32 %v693, 7
        %v695 = vsub.s32 %v692, %v694
        %v696 = vrot.slane %v688, %v695
        %v698 = vunpack.c.l.s4 1934713408
        %v699 = vunpack.c.0.s8 %v698
        %v700 = vlaneseq
        %v701 = vshrl.u32 %v700, 7
        %v702 = vsub.s32 %v699, %v701
        %v703 = vrot.slane %v689, %v702
        %v704 = vcombine.low %v679, %v687
        %v705 = vcombine.high %v679, %v687
        %v707 = vunpack.c.l.s4 1934713408
        %v708 = vunpack.c.0.s8 %v707
        %v709 = vlaneseq
        %v710 = vshrl.u32 %v709, 7
        %v711 = vsub.s32 %v708, %v710
        %v712 = vrot.slane %v704, %v711
        %v714 = vunpack.c.l.s4 1934713408
        %v715 = vunpack.c.0.s8 %v714
        %v716 = vlaneseq
        %v717 = vshrl.u32 %v716, 7
        %v718 = vsub.s32 %v715, %v717
        %v719 = vrot.slane %v705, %v718
        %v720 = vcombine.low %v696, %v712
        %v721 = vcombine.high %v696, %v712
        %v722 = vcombine.low %v703, %v719
        %v723 = vcombine.high %v703, %v719
        %v724 = vpack.c.bf16 %v648, %v648
        %v725 = vpack.c.bf16 %v649, %v649
        %v726 = vpack.c.bf16 %v650, %v650
        %v727 = vpack.c.bf16 %v651, %v651
        %v728 = vpack.c.bf16 %v652, %v652
        %v729 = vpack.c.bf16 %v653, %v653
        %v730 = vpack.c.bf16 %v654, %v654
        %v731 = vpack.c.bf16 %v655, %v655
        %v732 = vpack.c.bf16 %v720, %v720
        %v733 = vpack.c.bf16 %v721, %v721
        %v734 = vpack.c.bf16 %v722, %v722
        %v735 = vpack.c.bf16 %v723, %v723
        %vm736 = vcmask 64512
        %v738 = vsel %vm736, %v724, 0
        %v741 = vsel %vm736, %v728, 0
        %743 = vmatprep.subr.bf16.mxu0 0
        %744 = vmatpush1.bf16.xpose.msra.mxu0 %v741
        %745 = vmatprep.subr.bf16.mxu0 0
        %746 = vmatpush1.bf16.xpose.msra.mxu0 0
        %747 = vmatprep.subr.bf16.mxu0 0
        %748 = vmatpush1.bf16.xpose.msra.mxu0 0
        %749 = vmatprep.subr.bf16.mxu0 0
        %750 = vmatpush1.bf16.xpose.msra.mxu0 0
        %751 = vmatprep.subr.bf16.mxu0 0
        %752 = vmatpush1.bf16.xpose.msra.mxu0 0
        %753 = vmatprep.subr.bf16.mxu0 0
        %754 = vmatpush1.bf16.xpose.msra.mxu0 0
        %755 = vmatprep.subr.bf16.mxu0 0
        %756 = vmatpush1.bf16.xpose.msra.mxu0 0
        %757 = vmatprep.subr.bf16.mxu0 0
        %758 = vmatpush1.bf16.xpose.msra.mxu0 0
        %759 = vmatprep.subr.bf16.mxu0 0
        %760 = vmatpush1.bf16.xpose.msra.mxu0 0
        %761 = vmatprep.subr.bf16.mxu0 0
        %762 = vmatpush1.bf16.xpose.msra.mxu0 0
        %763 = vmatprep.subr.bf16.mxu0 0
        %764 = vmatpush1.bf16.xpose.msra.mxu0 0
        %765 = vmatprep.subr.bf16.mxu0 0
        %766 = vmatpush1.bf16.xpose.msra.mxu0 0
        %767 = vmatprep.subr.bf16.mxu0 0
        %768 = vmatpush1.bf16.xpose.msra.mxu0 0
        %769 = vmatprep.subr.bf16.mxu0 0
        %770 = vmatpush1.bf16.xpose.msra.mxu0 0
        %771 = vmatprep.subr.bf16.mxu0 0
        %772 = vmatpush1.bf16.xpose.msra.mxu0 0
        %773 = vmatprep.subr.bf16.mxu0 0
        %774 = vmatpush1.bf16.xpose.msra.mxu0 0
        %775 = vmatprep.mubr.bf16.mxu0 0
        %776 = vmatmul.mubr.bf16.gmra.mrb[0].mxu0 %v738
        %v777 = vpop.f32.mrb[0].mxu0
        %v778 = vadd.f32 0.0, %v777
        %v779 = vpop.f32.mrb[0].mxu0
        %v780 = vpop.f32.mrb[0].mxu0
        %v781 = vpop.f32.mrb[0].mxu0
        %782 = vdwg.mxu0
        %v784 = vsel %vm736, %v725, 0
        %v787 = vsel %vm736, %v729, 0
        %789 = vmatprep.subr.bf16.mxu0 0
        %790 = vmatpush1.bf16.xpose.msra.mxu0 %v787
        %791 = vmatprep.subr.bf16.mxu0 0
        %792 = vmatpush1.bf16.xpose.msra.mxu0 0
        %793 = vmatprep.subr.bf16.mxu0 0
        %794 = vmatpush1.bf16.xpose.msra.mxu0 0
        %795 = vmatprep.subr.bf16.mxu0 0
        %796 = vmatpush1.bf16.xpose.msra.mxu0 0
        %797 = vmatprep.subr.bf16.mxu0 0
        %798 = vmatpush1.bf16.xpose.msra.mxu0 0
        %799 = vmatprep.subr.bf16.mxu0 0
        %800 = vmatpush1.bf16.xpose.msra.mxu0 0
        %801 = vmatprep.subr.bf16.mxu0 0
        %802 = vmatpush1.bf16.xpose.msra.mxu0 0
        %803 = vmatprep.subr.bf16.mxu0 0
        %804 = vmatpush1.bf16.xpose.msra.mxu0 0
        %805 = vmatprep.subr.bf16.mxu0 0
        %806 = vmatpush1.bf16.xpose.msra.mxu0 0
        %807 = vmatprep.subr.bf16.mxu0 0
        %808 = vmatpush1.bf16.xpose.msra.mxu0 0
        %809 = vmatprep.subr.bf16.mxu0 0
        %810 = vmatpush1.bf16.xpose.msra.mxu0 0
        %811 = vmatprep.subr.bf16.mxu0 0
        %812 = vmatpush1.bf16.xpose.msra.mxu0 0
        %813 = vmatprep.subr.bf16.mxu0 0
        %814 = vmatpush1.bf16.xpose.msra.mxu0 0
        %815 = vmatprep.subr.bf16.mxu0 0
        %816 = vmatpush1.bf16.xpose.msra.mxu0 0
        %817 = vmatprep.subr.bf16.mxu0 0
        %818 = vmatpush1.bf16.xpose.msra.mxu0 0
        %819 = vmatprep.subr.bf16.mxu0 0
        %820 = vmatpush1.bf16.xpose.msra.mxu0 0
        %821 = vmatprep.mubr.bf16.mxu0 0
        %822 = vmatmul.mubr.bf16.gmra.mrb[0].mxu0 %v784
        %v823 = vpop.f32.mrb[0].mxu0
        %v824 = vadd.f32 0.0, %v823
        %v825 = vpop.f32.mrb[0].mxu0
        %v826 = vpop.f32.mrb[0].mxu0
        %v827 = vpop.f32.mrb[0].mxu0
        %828 = vdwg.mxu0
        %v830 = vsel %vm736, %v726, 0
        %v833 = vsel %vm736, %v730, 0
        %835 = vmatprep.subr.bf16.mxu0 0
        %836 = vmatpush1.bf16.xpose.msra.mxu0 %v833
        %837 = vmatprep.subr.bf16.mxu0 0
        %838 = vmatpush1.bf16.xpose.msra.mxu0 0
        %839 = vmatprep.subr.bf16.mxu0 0
        %840 = vmatpush1.bf16.xpose.msra.mxu0 0
        %841 = vmatprep.subr.bf16.mxu0 0
        %842 = vmatpush1.bf16.xpose.msra.mxu0 0
        %843 = vmatprep.subr.bf16.mxu0 0
        %844 = vmatpush1.bf16.xpose.msra.mxu0 0
        %845 = vmatprep.subr.bf16.mxu0 0
        %846 = vmatpush1.bf16.xpose.msra.mxu0 0
        %847 = vmatprep.subr.bf16.mxu0 0
        %848 = vmatpush1.bf16.xpose.msra.mxu0 0
        %849 = vmatprep.subr.bf16.mxu0 0
        %850 = vmatpush1.bf16.xpose.msra.mxu0 0
        %851 = vmatprep.subr.bf16.mxu0 0
        %852 = vmatpush1.bf16.xpose.msra.mxu0 0
        %853 = vmatprep.subr.bf16.mxu0 0
        %854 = vmatpush1.bf16.xpose.msra.mxu0 0
        %855 = vmatprep.subr.bf16.mxu0 0
        %856 = vmatpush1.bf16.xpose.msra.mxu0 0
        %857 = vmatprep.subr.bf16.mxu0 0
        %858 = vmatpush1.bf16.xpose.msra.mxu0 0
        %859 = vmatprep.subr.bf16.mxu0 0
        %860 = vmatpush1.bf16.xpose.msra.mxu0 0
        %861 = vmatprep.subr.bf16.mxu0 0
        %862 = vmatpush1.bf16.xpose.msra.mxu0 0
        %863 = vmatprep.subr.bf16.mxu0 0
        %864 = vmatpush1.bf16.xpose.msra.mxu0 0
        %865 = vmatprep.subr.bf16.mxu0 0
        %866 = vmatpush1.bf16.xpose.msra.mxu0 0
        %867 = vmatprep.mubr.bf16.mxu0 0
        %868 = vmatmul.mubr.bf16.gmra.mrb[0].mxu0 %v830
        %v869 = vpop.f32.mrb[0].mxu0
        %v870 = vadd.f32 0.0, %v869
        %v871 = vpop.f32.mrb[0].mxu0
        %v872 = vpop.f32.mrb[0].mxu0
        %v873 = vpop.f32.mrb[0].mxu0
        %874 = vdwg.mxu0
        %v876 = vsel %vm736, %v727, 0
        %v879 = vsel %vm736, %v731, 0
        %881 = vmatprep.subr.bf16.mxu0 0
        %882 = vmatpush1.bf16.xpose.msra.mxu0 %v879
        %883 = vmatprep.subr.bf16.mxu0 0
        %884 = vmatpush1.bf16.xpose.msra.mxu0 0
        %885 = vmatprep.subr.bf16.mxu0 0
        %886 = vmatpush1.bf16.xpose.msra.mxu0 0
        %887 = vmatprep.subr.bf16.mxu0 0
        %888 = vmatpush1.bf16.xpose.msra.mxu0 0
        %889 = vmatprep.subr.bf16.mxu0 0
        %890 = vmatpush1.bf16.xpose.msra.mxu0 0
        %891 = vmatprep.subr.bf16.mxu0 0
        %892 = vmatpush1.bf16.xpose.msra.mxu0 0
        %893 = vmatprep.subr.bf16.mxu0 0
        %894 = vmatpush1.bf16.xpose.msra.mxu0 0
        %895 = vmatprep.subr.bf16.mxu0 0
        %896 = vmatpush1.bf16.xpose.msra.mxu0 0
        %897 = vmatprep.subr.bf16.mxu0 0
        %898 = vmatpush1.bf16.xpose.msra.mxu0 0
        %899 = vmatprep.subr.bf16.mxu0 0
        %900 = vmatpush1.bf16.xpose.msra.mxu0 0
        %901 = vmatprep.subr.bf16.mxu0 0
        %902 = vmatpush1.bf16.xpose.msra.mxu0 0
        %903 = vmatprep.subr.bf16.mxu0 0
        %904 = vmatpush1.bf16.xpose.msra.mxu0 0
        %905 = vmatprep.subr.bf16.mxu0 0
        %906 = vmatpush1.bf16.xpose.msra.mxu0 0
        %907 = vmatprep.subr.bf16.mxu0 0
        %908 = vmatpush1.bf16.xpose.msra.mxu0 0
        %909 = vmatprep.subr.bf16.mxu0 0
        %910 = vmatpush1.bf16.xpose.msra.mxu0 0
        %911 = vmatprep.subr.bf16.mxu0 0
        %912 = vmatpush1.bf16.xpose.msra.mxu0 0
        %913 = vmatprep.mubr.bf16.mxu0 0
        %914 = vmatmul.mubr.bf16.gmra.mrb[0].mxu0 %v876
        %v915 = vpop.f32.mrb[0].mxu0
        %v916 = vadd.f32 0.0, %v915
        %v917 = vpop.f32.mrb[0].mxu0
        %v918 = vpop.f32.mrb[0].mxu0
        %v919 = vpop.f32.mrb[0].mxu0
        %920 = vdwg.mxu0
        %v921 = vlaneseq
        %v922 = vshrl.u32 %v921, 7
        %v923 = vlaneseq
        %v924 = vand.u32 %v923, 127
        %vm925 = vcmp.ge.s32.totalorder %v922, %v924
        %v926 = vsub.s32 %v922, 2
        %v927 = vadd.s32 %v926, 1
        %vm928 = vcmp.ge.s32.totalorder %v924, %v927
        %vm929 = vcmp.le.s32.totalorder %v924, %v922
        %vm930 = vmand %vm928, %vm929
        %vm931 = vcmp.lt.s32.totalorder %v922, 1
        %vm932 = vcmp.lt.s32.totalorder %v924, 1
        %vm933 = vmor %vm931, %vm932
        %vm934 = vmor %vm930, %vm933
        %v935 = vld [vmem:[%s2] sm:$0xff]
        %v936 = vld [vmem:[%s2 + $0x8] sm:$0xff]
        %v937 = vld [vmem:[%s2 + $0x10] sm:$0xff]
        %v938 = vld [vmem:[%s2 + $0x18] sm:$0xff]
        %939 = vset.pattern.permute.xlu0 0
        %940 = vperm.xlu0 %939, %v935
        %v941 = vpop.permute.xlu0 %940
        %942 = vset.pattern.permute.xlu0 0
        %943 = vperm.xlu0 %942, %v936
        %v944 = vpop.permute.xlu0 %943
        %945 = vset.pattern.permute.xlu0 0
        %946 = vperm.xlu0 %945, %v937
        %v947 = vpop.permute.xlu0 %946
        %948 = vset.pattern.permute.xlu0 0
        %949 = vperm.xlu0 %948, %v938
        %v950 = vpop.permute.xlu0 %949
        %vm951 = vcmp.eq.s32.totalorder %v924, %v941
        %vm952 = vcmp.eq.s32.totalorder %v924, %v944
        %vm953 = vcmp.eq.s32.totalorder %v924, %v947
        %vm954 = vcmp.eq.s32.totalorder %v924, %v950
        %955 = vset.pattern.permute.xlu0 1
        %956 = vperm.xlu0 %955, %v935
        %v957 = vpop.permute.xlu0 %956
        %958 = vset.pattern.permute.xlu0 1
        %959 = vperm.xlu0 %958, %v936
        %v960 = vpop.permute.xlu0 %959
        %961 = vset.pattern.permute.xlu0 1
        %962 = vperm.xlu0 %961, %v937
        %v963 = vpop.permute.xlu0 %962
        %964 = vset.pattern.permute.xlu0 1
        %965 = vperm.xlu0 %964, %v938
        %v966 = vpop.permute.xlu0 %965
        %vm967 = vcmp.eq.s32.totalorder %v924, %v957
        %vm968 = vcmp.eq.s32.totalorder %v924, %v960
        %vm969 = vcmp.eq.s32.totalorder %v924, %v963
        %vm970 = vcmp.eq.s32.totalorder %v924, %v966
        %vm971 = vmor %vm951, %vm967
        %vm972 = vmor %vm952, %vm968
        %vm973 = vmor %vm953, %vm969
        %vm974 = vmor %vm954, %vm970
        %v975 = vsel %vm934, 1, 0
        %vm976 = vcmp.eq.s32.totalorder %v975, 1
        %vm977 = vmor %vm976, %vm971
        %vm978 = vmor %vm976, %vm972
        %vm979 = vmor %vm976, %vm973
        %vm980 = vmor %vm976, %vm974
        %v981 = vsel %vm925, 1, 0
        %vm982 = vcmp.eq.s32.totalorder %v981, 1
        %vm983 = vmand %vm977, %vm982
        %vm984 = vmand %vm978, %vm982
        %vm985 = vmand %vm979, %vm982
        %vm986 = vmand %vm980, %vm982
        %v987 = vsel %vm983, %v778, -1e+09
        %v988 = vsel %vm984, %v824, -1e+09
        %v989 = vsel %vm985, %v870, -1e+09
        %v990 = vsel %vm986, %v916, -1e+09
        %v991 = vsel %vm736, %v987, -inf
        %992 = vmax.xlane.f32.xlu0 %v991
        %v993 = vpop.xlane.xlu0 %992
        %v994 = vsel %vm736, %v988, -inf
        %995 = vmax.xlane.f32.xlu0 %v994
        %v996 = vpop.xlane.xlu0 %995
        %v997 = vsel %vm736, %v989, -inf
        %998 = vmax.xlane.f32.xlu0 %v997
        %v999 = vpop.xlane.xlu0 %998
        %v1000 = vsel %vm736, %v990, -inf
        %1001 = vmax.xlane.f32.xlu0 %v1000
        %v1002 = vpop.xlane.xlu0 %1001
        %v1003 = vsub.f32 %v987, %v993
        %v1004 = vsub.f32 %v988, %v996
        %v1005 = vsub.f32 %v989, %v999
        %v1006 = vsub.f32 %v990, %v1002
        %v1007 = vmul.f32 %v1003, 1.442695
        %v1008 = vpow.pop %v1007
        %v1009 = vmul.f32 %v1004, 1.442695
        %v1010 = vpow.pop %v1009
        %v1011 = vmul.f32 %v1005, 1.442695
        %v1012 = vpow.pop %v1011
        %v1013 = vmul.f32 %v1006, 1.442695
        %v1014 = vpow.pop %v1013
        %v1015 = vsel %vm736, %v1008, 0.0
        %1016 = vadd.xlane.f32.xlu0 %v1015
        %v1017 = vpop.xlane.xlu0 %1016
        %v1018 = vsel %vm736, %v1010, 0.0
        %1019 = vadd.xlane.f32.xlu0 %v1018
        %v1020 = vpop.xlane.xlu0 %1019
        %v1021 = vsel %vm736, %v1012, 0.0
        %1022 = vadd.xlane.f32.xlu0 %v1021
        %v1023 = vpop.xlane.xlu0 %1022
        %v1024 = vsel %vm736, %v1014, 0.0
        %1025 = vadd.xlane.f32.xlu0 %v1024
        %v1026 = vpop.xlane.xlu0 %1025
        %v1027 = vrcp.pop %v1017
        %v1028 = vrcp.pop %v1020
        %v1029 = vrcp.pop %v1023
        %v1030 = vrcp.pop %v1026
        %v1031 = vmul.f32 %v1008, %v1027
        %v1032 = vmul.f32 %v1010, %v1028
        %v1033 = vmul.f32 %v1012, %v1029
        %v1034 = vmul.f32 %v1014, %v1030
        %v1035 = vpack.c.bf16 %v1031, %v1031
        %v1036 = vpack.c.bf16 %v1032, %v1032
        %v1037 = vpack.c.bf16 %v1033, %v1033
        %v1038 = vpack.c.bf16 %v1034, %v1034
        %v1040 = vsel %vm736, %v1035, 0
        %vm1042 = vcmask 1043456
        %v1044 = vsel %vm1042, %v732, 0
        %1046 = vmatprep.subr.bf16.mxu0 0
        %1047 = vmatpush1.bf16.msra.mxu0 %v1044
        %1048 = vmatprep.subr.bf16.mxu0 0
        %1049 = vmatpush1.bf16.msra.mxu0 0
        %1050 = vmatprep.subr.bf16.mxu0 0
        %1051 = vmatpush1.bf16.msra.mxu0 0
        %1052 = vmatprep.subr.bf16.mxu0 0
        %1053 = vmatpush1.bf16.msra.mxu0 0
        %1054 = vmatprep.subr.bf16.mxu0 0
        %1055 = vmatpush1.bf16.msra.mxu0 0
        %1056 = vmatprep.subr.bf16.mxu0 0
        %1057 = vmatpush1.bf16.msra.mxu0 0
        %1058 = vmatprep.subr.bf16.mxu0 0
        %1059 = vmatpush1.bf16.msra.mxu0 0
        %1060 = vmatprep.subr.bf16.mxu0 0
        %1061 = vmatpush1.bf16.msra.mxu0 0
        %1062 = vmatprep.subr.bf16.mxu0 0
        %1063 = vmatpush1.bf16.msra.mxu0 0
        %1064 = vmatprep.subr.bf16.mxu0 0
        %1065 = vmatpush1.bf16.msra.mxu0 0
        %1066 = vmatprep.subr.bf16.mxu0 0
        %1067 = vmatpush1.bf16.msra.mxu0 0
        %1068 = vmatprep.subr.bf16.mxu0 0
        %1069 = vmatpush1.bf16.msra.mxu0 0
        %1070 = vmatprep.subr.bf16.mxu0 0
        %1071 = vmatpush1.bf16.msra.mxu0 0
        %1072 = vmatprep.subr.bf16.mxu0 0
        %1073 = vmatpush1.bf16.msra.mxu0 0
        %1074 = vmatprep.subr.bf16.mxu0 0
        %1075 = vmatpush1.bf16.msra.mxu0 0
        %1076 = vmatprep.subr.bf16.mxu0 0
        %1077 = vmatpush1.bf16.msra.mxu0 0
        %1078 = vmatprep.mubr.bf16.mxu0 0
        %1079 = vmatmul.mubr.bf16.gmra.mrb[0].mxu0 %v1040
        %v1080 = vpop.f32.mrb[0].mxu0
        %v1081 = vadd.f32 0.0, %v1080
        %v1082 = vpop.f32.mrb[0].mxu0
        %v1083 = vpop.f32.mrb[0].mxu0
        %v1084 = vpop.f32.mrb[0].mxu0
        %1085 = vdwg.mxu0
        %v1087 = vsel %vm736, %v1036, 0
        %v1090 = vsel %vm1042, %v733, 0
        %1092 = vmatprep.subr.bf16.mxu0 0
        %1093 = vmatpush1.bf16.msra.mxu0 %v1090
        %1094 = vmatprep.subr.bf16.mxu0 0
        %1095 = vmatpush1.bf16.msra.mxu0 0
        %1096 = vmatprep.subr.bf16.mxu0 0
        %1097 = vmatpush1.bf16.msra.mxu0 0
        %1098 = vmatprep.subr.bf16.mxu0 0
        %1099 = vmatpush1.bf16.msra.mxu0 0
        %1100 = vmatprep.subr.bf16.mxu0 0
        %1101 = vmatpush1.bf16.msra.mxu0 0
        %1102 = vmatprep.subr.bf16.mxu0 0
        %1103 = vmatpush1.bf16.msra.mxu0 0
        %1104 = vmatprep.subr.bf16.mxu0 0
        %1105 = vmatpush1.bf16.msra.mxu0 0
        %1106 = vmatprep.subr.bf16.mxu0 0
        %1107 = vmatpush1.bf16.msra.mxu0 0
        %1108 = vmatprep.subr.bf16.mxu0 0
        %1109 = vmatpush1.bf16.msra.mxu0 0
        %1110 = vmatprep.subr.bf16.mxu0 0
        %1111 = vmatpush1.bf16.msra.mxu0 0
        %1112 = vmatprep.subr.bf16.mxu0 0
        %1113 = vmatpush1.bf16.msra.mxu0 0
        %1114 = vmatprep.subr.bf16.mxu0 0
        %1115 = vmatpush1.bf16.msra.mxu0 0
        %1116 = vmatprep.subr.bf16.mxu0 0
        %1117 = vmatpush1.bf16.msra.mxu0 0
        %1118 = vmatprep.subr.bf16.mxu0 0
        %1119 = vmatpush1.bf16.msra.mxu0 0
        %1120 = vmatprep.subr.bf16.mxu0 0
        %1121 = vmatpush1.bf16.msra.mxu0 0
        %1122 = vmatprep.subr.bf16.mxu0 0
        %1123 = vmatpush1.bf16.msra.mxu0 0
        %1124 = vmatprep.mubr.bf16.mxu0 0
        %1125 = vmatmul.mubr.bf16.gmra.mrb[0].mxu0 %v1087
        %v1126 = vpop.f32.mrb[0].mxu0
        %v1127 = vadd.f32 0.0, %v1126
        %v1128 = vpop.f32.mrb[0].mxu0
        %v1129 = vpop.f32.mrb[0].mxu0
        %v1130 = vpop.f32.mrb[0].mxu0
        %1131 = vdwg.mxu0
        %v1133 = vsel %vm736, %v1037, 0
        %v1136 = vsel %vm1042, %v734, 0
        %1138 = vmatprep.subr.bf16.mxu0 0
        %1139 = vmatpush1.bf16.msra.mxu0 %v1136
        %1140 = vmatprep.subr.bf16.mxu0 0
        %1141 = vmatpush1.bf16.msra.mxu0 0
        %1142 = vmatprep.subr.bf16.mxu0 0
        %1143 = vmatpush1.bf16.msra.mxu0 0
        %1144 = vmatprep.subr.bf16.mxu0 0
        %1145 = vmatpush1.bf16.msra.mxu0 0
        %1146 = vmatprep.subr.bf16.mxu0 0
        %1147 = vmatpush1.bf16.msra.mxu0 0
        %1148 = vmatprep.subr.bf16.mxu0 0
        %1149 = vmatpush1.bf16.msra.mxu0 0
        %1150 = vmatprep.subr.bf16.mxu0 0
        %1151 = vmatpush1.bf16.msra.mxu0 0
        %1152 = vmatprep.subr.bf16.mxu0 0
        %1153 = vmatpush1.bf16.msra.mxu0 0
        %1154 = vmatprep.subr.bf16.mxu0 0
        %1155 = vmatpush1.bf16.msra.mxu0 0
        %1156 = vmatprep.subr.bf16.mxu0 0
        %1157 = vmatpush1.bf16.msra.mxu0 0
        %1158 = vmatprep.subr.bf16.mxu0 0
        %1159 = vmatpush1.bf16.msra.mxu0 0
        %1160 = vmatprep.subr.bf16.mxu0 0
        %1161 = vmatpush1.bf16.msra.mxu0 0
        %1162 = vmatprep.subr.bf16.mxu0 0
        %1163 = vmatpush1.bf16.msra.mxu0 0
        %1164 = vmatprep.subr.bf16.mxu0 0
        %1165 = vmatpush1.bf16.msra.mxu0 0
        %1166 = vmatprep.subr.bf16.mxu0 0
        %1167 = vmatpush1.bf16.msra.mxu0 0
        %1168 = vmatprep.subr.bf16.mxu0 0
        %1169 = vmatpush1.bf16.msra.mxu0 0
        %1170 = vmatprep.mubr.bf16.mxu0 0
        %1171 = vmatmul.mubr.bf16.gmra.mrb[0].mxu0 %v1133
        %v1172 = vpop.f32.mrb[0].mxu0
        %v1173 = vadd.f32 0.0, %v1172
        %v1174 = vpop.f32.mrb[0].mxu0
        %v1175 = vpop.f32.mrb[0].mxu0
        %v1176 = vpop.f32.mrb[0].mxu0
        %1177 = vdwg.mxu0
        %v1179 = vsel %vm736, %v1038, 0
        %v1182 = vsel %vm1042, %v735, 0
        %1184 = vmatprep.subr.bf16.mxu0 0
        %1185 = vmatpush1.bf16.msra.mxu0 %v1182
        %1186 = vmatprep.subr.bf16.mxu0 0
        %1187 = vmatpush1.bf16.msra.mxu0 0
        %1188 = vmatprep.subr.bf16.mxu0 0
        %1189 = vmatpush1.bf16.msra.mxu0 0
        %1190 = vmatprep.subr.bf16.mxu0 0
        %1191 = vmatpush1.bf16.msra.mxu0 0
        %1192 = vmatprep.subr.bf16.mxu0 0
        %1193 = vmatpush1.bf16.msra.mxu0 0
        %1194 = vmatprep.subr.bf16.mxu0 0
        %1195 = vmatpush1.bf16.msra.mxu0 0
        %1196 = vmatprep.subr.bf16.mxu0 0
        %1197 = vmatpush1.bf16.msra.mxu0 0
        %1198 = vmatprep.subr.bf16.mxu0 0
        %1199 = vmatpush1.bf16.msra.mxu0 0
        %1200 = vmatprep.subr.bf16.mxu0 0
        %1201 = vmatpush1.bf16.msra.mxu0 0
        %1202 = vmatprep.subr.bf16.mxu0 0
        %1203 = vmatpush1.bf16.msra.mxu0 0
        %1204 = vmatprep.subr.bf16.mxu0 0
        %1205 = vmatpush1.bf16.msra.mxu0 0
        %1206 = vmatprep.subr.bf16.mxu0 0
        %1207 = vmatpush1.bf16.msra.mxu0 0
        %1208 = vmatprep.subr.bf16.mxu0 0
        %1209 = vmatpush1.bf16.msra.mxu0 0
        %1210 = vmatprep.subr.bf16.mxu0 0
        %1211 = vmatpush1.bf16.msra.mxu0 0
        %1212 = vmatprep.subr.bf16.mxu0 0
        %1213 = vmatpush1.bf16.msra.mxu0 0
        %1214 = vmatprep.subr.bf16.mxu0 0
        %1215 = vmatpush1.bf16.msra.mxu0 0
        %1216 = vmatprep.mubr.bf16.mxu0 0
        %1217 = vmatmul.mubr.bf16.gmra.mrb[0].mxu0 %v1179
        %v1218 = vpop.f32.mrb[0].mxu0
        %v1219 = vadd.f32 0.0, %v1218
        %v1220 = vpop.f32.mrb[0].mxu0
        %v1221 = vpop.f32.mrb[0].mxu0
        %v1222 = vpop.f32.mrb[0].mxu0
        %1223 = vdwg.mxu0
        %v1224 = vpack.c.bf16 %v1081, %v1081
        %v1225 = vpack.c.bf16 %v1127, %v1127
        %v1226 = vpack.c.bf16 %v1173, %v1173
        %v1227 = vpack.c.bf16 %v1219, %v1219
        %v1228 = vld [vmem:[%s3] sm:$0xf]
        %v1229 = vld [vmem:[%s3 + $0x4] sm:$0xf]
        %v1230 = vld [vmem:[%s3 + $0x8] sm:$0xf]
        %v1231 = vld [vmem:[%s3 + $0xc] sm:$0xf]
        %v1233 = vsel %vm736, %v1224, 0
        %v1236 = vsel %vm1042, %v1228, 0
        %1238 = vmatprep.subr.bf16.mxu0 0
        %1239 = vmatpush1.bf16.msra.mxu0 %v1236
        %1240 = vmatprep.subr.bf16.mxu0 0
        %1241 = vmatpush1.bf16.msra.mxu0 0
        %1242 = vmatprep.subr.bf16.mxu0 0
        %1243 = vmatpush1.bf16.msra.mxu0 0
        %1244 = vmatprep.subr.bf16.mxu0 0
        %1245 = vmatpush1.bf16.msra.mxu0 0
        %1246 = vmatprep.subr.bf16.mxu0 0
        %1247 = vmatpush1.bf16.msra.mxu0 0
        %1248 = vmatprep.subr.bf16.mxu0 0
        %1249 = vmatpush1.bf16.msra.mxu0 0
        %1250 = vmatprep.subr.bf16.mxu0 0
        %1251 = vmatpush1.bf16.msra.mxu0 0
        %1252 = vmatprep.subr.bf16.mxu0 0
        %1253 = vmatpush1.bf16.msra.mxu0 0
        %1254 = vmatprep.subr.bf16.mxu0 0
        %1255 = vmatpush1.bf16.msra.mxu0 0
        %1256 = vmatprep.subr.bf16.mxu0 0
        %1257 = vmatpush1.bf16.msra.mxu0 0
        %1258 = vmatprep.subr.bf16.mxu0 0
        %1259 = vmatpush1.bf16.msra.mxu0 0
        %1260 = vmatprep.subr.bf16.mxu0 0
        %1261 = vmatpush1.bf16.msra.mxu0 0
        %1262 = vmatprep.subr.bf16.mxu0 0
        %1263 = vmatpush1.bf16.msra.mxu0 0
        %1264 = vmatprep.subr.bf16.mxu0 0
        %1265 = vmatpush1.bf16.msra.mxu0 0
        %1266 = vmatprep.subr.bf16.mxu0 0
        %1267 = vmatpush1.bf16.msra.mxu0 0
        %1268 = vmatprep.subr.bf16.mxu0 0
        %1269 = vmatpush1.bf16.msra.mxu0 0
        %1270 = vmatprep.mubr.bf16.mxu0 0
        %1271 = vmatmul.mubr.bf16.gmra.mrb[0].mxu0 %v1233
        %v1272 = vpop.f32.mrb[0].mxu0
        %v1273 = vadd.f32 0.0, %v1272
        %v1274 = vpop.f32.mrb[0].mxu0
        %v1275 = vpop.f32.mrb[0].mxu0
        %v1276 = vpop.f32.mrb[0].mxu0
        %1277 = vdwg.mxu0
        %v1279 = vsel %vm736, %v1225, 0
        %v1282 = vsel %vm1042, %v1229, 0
        %1284 = vmatprep.subr.bf16.mxu0 0
        %1285 = vmatpush1.bf16.msra.mxu0 %v1282
        %1286 = vmatprep.subr.bf16.mxu0 0
        %1287 = vmatpush1.bf16.msra.mxu0 0
        %1288 = vmatprep.subr.bf16.mxu0 0
        %1289 = vmatpush1.bf16.msra.mxu0 0
        %1290 = vmatprep.subr.bf16.mxu0 0
        %1291 = vmatpush1.bf16.msra.mxu0 0
        %1292 = vmatprep.subr.bf16.mxu0 0
        %1293 = vmatpush1.bf16.msra.mxu0 0
        %1294 = vmatprep.subr.bf16.mxu0 0
        %1295 = vmatpush1.bf16.msra.mxu0 0
        %1296 = vmatprep.subr.bf16.mxu0 0
        %1297 = vmatpush1.bf16.msra.mxu0 0
        %1298 = vmatprep.subr.bf16.mxu0 0
        %1299 = vmatpush1.bf16.msra.mxu0 0
        %1300 = vmatprep.subr.bf16.mxu0 0
        %1301 = vmatpush1.bf16.msra.mxu0 0
        %1302 = vmatprep.subr.bf16.mxu0 0
        %1303 = vmatpush1.bf16.msra.mxu0 0
        %1304 = vmatprep.subr.bf16.mxu0 0
        %1305 = vmatpush1.bf16.msra.mxu0 0
        %1306 = vmatprep.subr.bf16.mxu0 0
        %1307 = vmatpush1.bf16.msra.mxu0 0
        %1308 = vmatprep.subr.bf16.mxu0 0
        %1309 = vmatpush1.bf16.msra.mxu0 0
        %1310 = vmatprep.subr.bf16.mxu0 0
        %1311 = vmatpush1.bf16.msra.mxu0 0
        %1312 = vmatprep.subr.bf16.mxu0 0
        %1313 = vmatpush1.bf16.msra.mxu0 0
        %1314 = vmatprep.subr.bf16.mxu0 0
        %1315 = vmatpush1.bf16.msra.mxu0 0
        %1316 = vmatprep.mubr.bf16.mxu0 0
        %1317 = vmatmul.mubr.bf16.gmra.mrb[0].mxu0 %v1279
        %v1318 = vpop.f32.mrb[0].mxu0
        %v1319 = vadd.f32 0.0, %v1318
        %v1320 = vpop.f32.mrb[0].mxu0
        %v1321 = vpop.f32.mrb[0].mxu0
        %v1322 = vpop.f32.mrb[0].mxu0
        %1323 = vdwg.mxu0
        %v1325 = vsel %vm736, %v1226, 0
        %v1328 = vsel %vm1042, %v1230, 0
        %1330 = vmatprep.subr.bf16.mxu0 0
        %1331 = vmatpush1.bf16.msra.mxu0 %v1328
        %1332 = vmatprep.subr.bf16.mxu0 0
        %1333 = vmatpush1.bf16.msra.mxu0 0
        %1334 = vmatprep.subr.bf16.mxu0 0
        %1335 = vmatpush1.bf16.msra.mxu0 0
        %1336 = vmatprep.subr.bf16.mxu0 0
        %1337 = vmatpush1.bf16.msra.mxu0 0
        %1338 = vmatprep.subr.bf16.mxu0 0
        %1339 = vmatpush1.bf16.msra.mxu0 0
        %1340 = vmatprep.subr.bf16.mxu0 0
        %1341 = vmatpush1.bf16.msra.mxu0 0
        %1342 = vmatprep.subr.bf16.mxu0 0
        %1343 = vmatpush1.bf16.msra.mxu0 0
        %1344 = vmatprep.subr.bf16.mxu0 0
        %1345 = vmatpush1.bf16.msra.mxu0 0
        %1346 = vmatprep.subr.bf16.mxu0 0
        %1347 = vmatpush1.bf16.msra.mxu0 0
        %1348 = vmatprep.subr.bf16.mxu0 0
        %1349 = vmatpush1.bf16.msra.mxu0 0
        %1350 = vmatprep.subr.bf16.mxu0 0
        %1351 = vmatpush1.bf16.msra.mxu0 0
        %1352 = vmatprep.subr.bf16.mxu0 0
        %1353 = vmatpush1.bf16.msra.mxu0 0
        %1354 = vmatprep.subr.bf16.mxu0 0
        %1355 = vmatpush1.bf16.msra.mxu0 0
        %1356 = vmatprep.subr.bf16.mxu0 0
        %1357 = vmatpush1.bf16.msra.mxu0 0
        %1358 = vmatprep.subr.bf16.mxu0 0
        %1359 = vmatpush1.bf16.msra.mxu0 0
        %1360 = vmatprep.subr.bf16.mxu0 0
        %1361 = vmatpush1.bf16.msra.mxu0 0
        %1362 = vmatprep.mubr.bf16.mxu0 0
        %1363 = vmatmul.mubr.bf16.gmra.mrb[0].mxu0 %v1325
        %v1364 = vpop.f32.mrb[0].mxu0
        %v1365 = vadd.f32 0.0, %v1364
        %v1366 = vpop.f32.mrb[0].mxu0
        %v1367 = vpop.f32.mrb[0].mxu0
        %v1368 = vpop.f32.mrb[0].mxu0
        %1369 = vdwg.mxu0
        %v1371 = vsel %vm736, %v1227, 0
        %v1374 = vsel %vm1042, %v1231, 0
        %1376 = vmatprep.subr.bf16.mxu0 0
        %1377 = vmatpush1.bf16.msra.mxu0 %v1374
        %1378 = vmatprep.subr.bf16.mxu0 0
        %1379 = vmatpush1.bf16.msra.mxu0 0
        %1380 = vmatprep.subr.bf16.mxu0 0
        %1381 = vmatpush1.bf16.msra.mxu0 0
        %1382 = vmatprep.subr.bf16.mxu0 0
        %1383 = vmatpush1.bf16.msra.mxu0 0
        %1384 = vmatprep.subr.bf16.mxu0 0
        %1385 = vmatpush1.bf16.msra.mxu0 0
        %1386 = vmatprep.subr.bf16.mxu0 0
        %1387 = vmatpush1.bf16.msra.mxu0 0
        %1388 = vmatprep.subr.bf16.mxu0 0
        %1389 = vmatpush1.bf16.msra.mxu0 0
        %1390 = vmatprep.subr.bf16.mxu0 0
        %1391 = vmatpush1.bf16.msra.mxu0 0
        %1392 = vmatprep.subr.bf16.mxu0 0
        %1393 = vmatpush1.bf16.msra.mxu0 0
        %1394 = vmatprep.subr.bf16.mxu0 0
        %1395 = vmatpush1.bf16.msra.mxu0 0
        %1396 = vmatprep.subr.bf16.mxu0 0
        %1397 = vmatpush1.bf16.msra.mxu0 0
        %1398 = vmatprep.subr.bf16.mxu0 0
        %1399 = vmatpush1.bf16.msra.mxu0 0
        %1400 = vmatprep.subr.bf16.mxu0 0
        %1401 = vmatpush1.bf16.msra.mxu0 0
        %1402 = vmatprep.subr.bf16.mxu0 0
        %1403 = vmatpush1.bf16.msra.mxu0 0
        %1404 = vmatprep.subr.bf16.mxu0 0
        %1405 = vmatpush1.bf16.msra.mxu0 0
        %1406 = vmatprep.subr.bf16.mxu0 0
        %1407 = vmatpush1.bf16.msra.mxu0 0
        %1408 = vmatprep.mubr.bf16.mxu0 0
        %1409 = vmatmul.mubr.bf16.gmra.mrb[0].mxu0 %v1371
        %v1410 = vpop.f32.mrb[0].mxu0
        %v1411 = vadd.f32 0.0, %v1410
        %v1412 = vpop.f32.mrb[0].mxu0
        %v1413 = vpop.f32.mrb[0].mxu0
        %v1414 = vpop.f32.mrb[0].mxu0
        %1415 = vdwg.mxu0
        %v1416 = vsel %vm238, %v1273, 0.0
        %v1417 = vsel %vm238, %v1319, 0.0
        %v1418 = vadd.f32 %v1416, %v1417
        %v1419 = vsel %vm238, %v1365, 0.0
        %v1420 = vadd.f32 %v1418, %v1419
        %v1421 = vsel %vm238, %v1411, 0.0
        %v1422 = vadd.f32 %v1420, %v1421
        %v1423 = vld [vmem:[%s4] sm:$0x1]
        %v1425 = vlaneseq
        %v1426 = vshrl.u32 %v1425, 7
        %v1427 = vsub.s32 0, %v1426
        %v1428 = vrot.slane %v1423, %v1427
        %v1430 = vadd.f32 %v1422, %v1428
        %v1431 = vpack.c.bf16 %v1430, %v1430
        %vm1432 = vcmask 257024
        %1433 = vst.msk [vmem:[%s215] sm:$0xf] %vm1432, %v1431
        %s1434 = sand.u32 %s137, 1
        %s1435 = scalar_lea.sflag [#allocation3], %s1434
        %s1436 = sand.u32 %s137, 1
        %s1437 = smul.addr %s1436, 4
        %s1438 = scalar_lea.vmem [#allocation2], %s1437
        // Predicated region
        $region41: #{tpu_custom_call.1} parent=39 // pred_check
          %p1439 = pneg %p147
        $region42: #{tpu_custom_call.1} parent=39 // pred_check_branch
          %1441 = sbr.rel (%p1439) target = $region44
        $region43: #{tpu_custom_call.1} parent=39 // pred_region
          %s1443 = ssub.s32 64, 64
          %1444 = vsyncadd %s1435, %s1443
          %s1445 = smul.addr %s19, 64
          %s1446 = scalar_lea.hbm %s5, %s1445
          %s1448 = sshll.u32 %s1438, 4
          %s1449 = int_to_ptr.vmem [resolvable:$true] %s1448
          %1451 = dma.vmem_to_hbm [thread:$0]  %s1449, 64, %s1446, %s1435
        $region44: #{tpu_custom_call.1} parent=39 // pred_fallthru
          _
      $region40: #{tpu_custom_call.1} parent=5 // pred_fallthru
        _
      %p1452 = scmp.le.s32.totalorder 2, %s14
      // Predicated region
      $region45: #{tpu_custom_call.1} parent=5 // pred_check
        %p1453 = pneg %p1452
      $region46: #{tpu_custom_call.1} parent=5 // pred_check_branch
        %1455 = sbr.rel (%p1453) target = $region48
      $region47: #{tpu_custom_call.1} parent=5 // pred_region
        %s1456 = ssub.s32 %s14, 2
        // Predicated region
        $region49: #{tpu_custom_call.1} parent=47 // pred_check
          %p1457 = pneg %p153
        $region50: #{tpu_custom_call.1} parent=47 // pred_check_branch
          %1459 = sbr.rel (%p1457) target = $region52
        $region51: #{tpu_custom_call.1} parent=47 // pred_region
          %s1460 = sand.u32 %s138, 1
          %s1461 = scalar_lea.sflag [#allocation3], %s1460
          %s1462 = sand.u32 %s138, 1
          %s1463 = smul.addr %s1462, 4
          %s1464 = scalar_lea.vmem [#allocation2], %s1463
          %1465 = dma.done %s1461, 64
        $region52: #{tpu_custom_call.1} parent=47 // pred_fallthru
          _
      $region48: #{tpu_custom_call.1} parent=5 // pred_fallthru
        _
    $region6: #{tpu_custom_call.1} parent=1 // loop_footer
      %s18 = sadd.s32 1, %s14
    $region7: #{tpu_custom_call.1} parent=1 // loop_footer_branch
      %13 = sbr.rel target = $region3
    $region8: #{tpu_custom_call.1} parent=1 // loop_exit
      _
    %1466 = vsyncpa [#allocation3], 1
    %s1467 = scalar_lea.sflag [#allocation3], 1
    %1468 = vsyncpa %s1467, 1

</llo_original>
